<compile_context>
chip_gen: v7x
topology: tpu7x:2x2x1
jax: 0.10.0
libtpu: 0.0.40
codegen_flags: <defaults>
</compile_context>

<pallas_src>
import numpy as np

import jax
import jax.numpy as jnp
from jax.experimental import pallas as pl
from jax.experimental.pallas import tpu as pltpu

# ----------------------------- configuration -------------------------------
B = 2                      # batch
C, H, W = 1, 16, 16        # input_size (NCHW)
IN_DIM = C * H * W         # input_dim = 256
ENC_DIM = 64               # encoder_dim
DEC_DIM = 64               # decoder_dim
Z_SIZE = 16                # z_size (even, required by coupling)
HALF = Z_SIZE // 2
MID_DIM = 80               # Coupling mid_dim
NUM_FLOWS = 2              # args.num_flows

PACK_W = 128               # lane-dense packed small-output width
SLAB_W = 128               # weight-slab lane width (f32)

# ------- weight-slab row layout (all offsets multiples of 8 sublanes) -------
R_ENC = 0                                  # (256, <=128): enc_w
R_HEAD = R_ENC + IN_DIM                    # (64,  <=128): [mu_w | var_w]
R_DEC = R_HEAD + ENC_DIM                   # (16,  <=128): dec_w
R_PMU_A = R_DEC + Z_SIZE                   # (64,   128): pmu_w[:, 0:128]
R_PMU_B = R_PMU_A + DEC_DIM                # (64,   128): pmu_w[:, 128:256]
R_FW1 = R_PMU_B + DEC_DIM                  # NUM_FLOWS x (16,  <=128)
R_FW2 = R_FW1 + NUM_FLOWS * Z_SIZE         # NUM_FLOWS x (80,  <=128)
R_FW3 = R_FW2 + NUM_FLOWS * MID_DIM        # NUM_FLOWS x (80,  <=128)
R_BIAS = R_FW3 + NUM_FLOWS * MID_DIM       # bias rows (one per row, lane 0)
BR_ENC, BR_HEAD, BR_DEC, BR_PMU_A, BR_PMU_B, BR_SCALE = 0, 1, 2, 3, 4, 5
BR_FB1 = 6
BR_FB2 = BR_FB1 + NUM_FLOWS
BR_FB3 = BR_FB2 + NUM_FLOWS
BIAS_ROWS = 16
N_ROWS = R_BIAS + BIAS_ROWS                # 832 rows -> slab = 832 x 128 f32


# ------------------------------- kernel ------------------------------------
def nice_vae_kernel(xe_ref, slab_ref, x_mean_ref, packed_ref):
    f32 = jnp.float32

    def relu(v):
        return jnp.maximum(v, 0.0)

    def softplus(v):  # numerically stable log(1 + exp(v))
        return jnp.maximum(v, 0.0) + jnp.log1p(jnp.exp(-jnp.abs(v)))

    def sigmoid(v):   # exact, bounded in [0, 1]; tanh runs on the EUP
        return 0.5 * (jnp.tanh(0.5 * v) + 1.0)

    def mm(a, row, nrows):   # f32 MXU matmul against a 128-lane slab block
        return jnp.dot(a, slab_ref[row:row + nrows, :],
                       preferred_element_type=f32)

    def bias(r):             # (1, 128) bias row, broadcast over batch
        return slab_ref[R_BIAS + r:R_BIAS + r + 1, :]

    x = xe_ref[:, 0:IN_DIM]                          # (B, 256) f32
    eps = xe_ref[:, IN_DIM:IN_DIM + Z_SIZE]          # (B, 16) f32
    nb = x.shape[0]

    # ----- encode: h = relu(x @ We + be); fused mu|var head, single matmul
    h = relu(mm(x, R_ENC, IN_DIM) + bias(BR_ENC))               # (B, 128)
    head = mm(h[:, 0:ENC_DIM], R_HEAD, ENC_DIM) + bias(BR_HEAD)  # (B, 128)
    mu = head[:, 0:Z_SIZE]
    var = jnp.clip(softplus(head[:, Z_SIZE:2 * Z_SIZE]), 1e-4, 5.0)

    # ----- reparameterize: z0 = eps * sqrt(var) + mu
    z0 = eps * jnp.sqrt(var) + mu
    z = z0

    # ----- NICE additive coupling flows.  Masks are baked into the packed
    # weights: fw1 rows of the transformed half are zero (h1 depends only on
    # the conditioning half); fw3 columns / fb3 entries of the conditioning
    # half are zero (shift is zero there), so z + shift is exact.
    for k in range(NUM_FLOWS):
        h1 = relu(mm(z, R_FW1 + k * Z_SIZE, Z_SIZE) + bias(BR_FB1 + k))
        h2 = relu(mm(h1[:, 0:MID_DIM], R_FW2 + k * MID_DIM, MID_DIM)
                  + bias(BR_FB2 + k))
        sh = mm(h2[:, 0:MID_DIM], R_FW3 + k * MID_DIM, MID_DIM) \
            + bias(BR_FB3 + k)
        z = z + sh[:, 0:Z_SIZE]

    # ----- Scaling flow: z_k = z * exp(s), log_det = sum(s)
    scale = bias(BR_SCALE)[:, 0:Z_SIZE]              # (1, 16)
    zk = z * jnp.exp(scale)
    ldj = jnp.sum(scale, axis=1, keepdims=True)      # (1, 1)

    # ----- decode: h = relu(zk @ Wd + bd); x_mean = sigmoid(h @ Wp + bp)
    hd = relu(mm(zk, R_DEC, Z_SIZE) + bias(BR_DEC))  # (B, 128)
    hd64 = hd[:, 0:DEC_DIM]
    xm_a = sigmoid(mm(hd64, R_PMU_A, DEC_DIM) + bias(BR_PMU_A))  # (B, 128)
    xm_b = sigmoid(mm(hd64, R_PMU_B, DEC_DIM) + bias(BR_PMU_B))  # (B, 128)
    x_mean_ref[...] = jnp.concatenate([xm_a, xm_b], axis=1)      # one store

    # ----- single lane-dense (B, 128) store for the small outputs
    ldj_b = jnp.zeros((nb, Z_SIZE), f32) + ldj
    pad = jnp.zeros((nb, PACK_W - 5 * Z_SIZE), f32)
    packed_ref[...] = jnp.concatenate([mu, var, z0, zk, ldj_b, pad], axis=1)


# ------------------------------ parameters ---------------------------------
def init_params(key):
    """Synthetic deterministic weights in the original (unpacked) layout."""
    keys = jax.random.split(key, 32)
    ki = iter(keys)

    def dense(shape, fan_in):
        return (jax.random.normal(next(ki), shape, jnp.float32) /
                jnp.sqrt(jnp.float32(fan_in)))

    p = {}
    # encoder MLP: Linear(IN_DIM, ENC_DIM) + ReLU
    p["enc_w"] = dense((IN_DIM, ENC_DIM), IN_DIM)
    p["enc_b"] = dense((1, ENC_DIM), IN_DIM)
    # mu / var heads
    p["mu_w"] = dense((ENC_DIM, Z_SIZE), ENC_DIM)
    p["mu_b"] = dense((1, Z_SIZE), ENC_DIM)
    p["var_w"] = dense((ENC_DIM, Z_SIZE), ENC_DIM)
    p["var_b"] = dense((1, Z_SIZE), ENC_DIM)

    # NICE couplings: only the nonzero halves are stored.
    # flow k conditions on dims with idx % 2 == k % 2 and shifts the others.
    fw1, fb1, fw2, fb2, fw3, fb3 = [], [], [], [], [], []
    for _ in range(NUM_FLOWS):
        fw1.append(dense((HALF, MID_DIM), HALF))     # conditioning half -> hidden
        fb1.append(dense((1, MID_DIM), HALF))
        fw2.append(dense((MID_DIM, MID_DIM), MID_DIM))
        fb2.append(dense((1, MID_DIM), MID_DIM))
        fw3.append(dense((MID_DIM, HALF), MID_DIM))  # hidden -> shift (transformed half)
        fb3.append(dense((1, HALF), MID_DIM))
    p["fw1"] = jnp.stack(fw1); p["fb1"] = jnp.stack(fb1)
    p["fw2"] = jnp.stack(fw2); p["fb2"] = jnp.stack(fb2)
    p["fw3"] = jnp.stack(fw3); p["fb3"] = jnp.stack(fb3)

    # Scaling flow parameter
    p["scale"] = 0.01 * jax.random.normal(next(ki), (1, Z_SIZE), jnp.float32)

    # decoder MLP: Linear(Z_SIZE, DEC_DIM) + ReLU ; p_mu: Linear(DEC_DIM, IN_DIM) + Sigmoid
    p["dec_w"] = dense((Z_SIZE, DEC_DIM), Z_SIZE)
    p["dec_b"] = dense((1, DEC_DIM), Z_SIZE)
    p["pmu_w"] = dense((DEC_DIM, IN_DIM), DEC_DIM)
    p["pmu_b"] = dense((1, IN_DIM), DEC_DIM)
    return p


def pack_params(p):
    """One-time host-side packing of ALL weights + biases into one f32 slab.

    Every matrix starts at an 8-sublane-aligned row offset, lane 0, zero-padded
    to the 128-lane slab width.  Coupling masks are baked in as zero rows/cols.
    """
    slab = np.zeros((N_ROWS, SLAB_W), np.float32)

    def putm(row, m):
        m = np.asarray(m, np.float32)
        slab[row:row + m.shape[0], 0:m.shape[1]] = m

    def putb(brow, v):
        v = np.asarray(v, np.float32).reshape(-1)
        slab[R_BIAS + brow, 0:v.shape[0]] = v

    putm(R_ENC, p["enc_w"])                                            # (256, 64)
    putm(R_HEAD, np.concatenate([np.asarray(p["mu_w"]),
                                 np.asarray(p["var_w"])], axis=1))     # (64, 32)
    putm(R_DEC, p["dec_w"])                                            # (16, 64)
    pmu = np.asarray(p["pmu_w"], np.float32)
    putm(R_PMU_A, pmu[:, 0:128])                                       # (64, 128)
    putm(R_PMU_B, pmu[:, 128:256])                                     # (64, 128)

    for k in range(NUM_FLOWS):
        cond = np.arange(k % 2, Z_SIZE, 2)        # conditioning dims
        trans = np.arange((k + 1) % 2, Z_SIZE, 2)  # transformed dims
        fw1_full = np.zeros((Z_SIZE, MID_DIM), np.float32)
        fw1_full[cond, :] = np.asarray(p["fw1"][k])
        putm(R_FW1 + k * Z_SIZE, fw1_full)
        putm(R_FW2 + k * MID_DIM, p["fw2"][k])
        fw3_full = np.zeros((MID_DIM, Z_SIZE), np.float32)
        fw3_full[:, trans] = np.asarray(p["fw3"][k])
        putm(R_FW3 + k * MID_DIM, fw3_full)
        putb(BR_FB1 + k, p["fb1"][k])
        putb(BR_FB2 + k, p["fb2"][k])
        fb3_full = np.zeros((Z_SIZE,), np.float32)
        fb3_full[trans] = np.asarray(p["fb3"][k]).reshape(-1)
        putb(BR_FB3 + k, fb3_full)

    putb(BR_ENC, p["enc_b"])
    putb(BR_HEAD, np.concatenate([np.asarray(p["mu_b"]),
                                  np.asarray(p["var_b"])], axis=1))
    putb(BR_DEC, p["dec_b"])
    pmu_b = np.asarray(p["pmu_b"], np.float32).reshape(-1)
    putb(BR_PMU_A, pmu_b[0:128])
    putb(BR_PMU_B, pmu_b[128:256])
    putb(BR_SCALE, p["scale"])
    return jnp.asarray(slab)


# ------------------------------- wrapper ------------------------------------
@jax.jit
def nice_vae_forward(x_nchw, eps, slab):
    """Returns (x_mean, z_mu, z_var, log_det_j, z0, zk) matching NICEVAE.forward."""
    nb = x_nchw.shape[0]
    x_flat = x_nchw.reshape(nb, -1).astype(jnp.float32)
    xe = jnp.concatenate([x_flat, eps.astype(jnp.float32)], axis=1)   # (B, 272)

    vmem = pl.BlockSpec(memory_space=pltpu.MemorySpace.VMEM)
    out_shapes = (
        jax.ShapeDtypeStruct((nb, IN_DIM), jnp.float32),      # x_mean (flat)
        jax.ShapeDtypeStruct((nb, PACK_W), jnp.float32),      # packed small outs
    )

    # Advisory cost estimate so XLA can overlap this tiny call with wrapper ops.
    matmul_k = (IN_DIM + ENC_DIM + Z_SIZE + DEC_DIM + DEC_DIM
                + NUM_FLOWS * (Z_SIZE + MID_DIM + MID_DIM))
    cost = pl.CostEstimate(
        flops=2 * nb * SLAB_W * matmul_k,
        transcendentals=nb * (IN_DIM + 3 * Z_SIZE) + Z_SIZE,
        bytes_accessed=4 * (N_ROWS * SLAB_W
                            + nb * (IN_DIM + Z_SIZE)
                            + nb * (IN_DIM + PACK_W)))

    x_mean_flat, small = pl.pallas_call(
        nice_vae_kernel,
        out_shape=out_shapes,
        in_specs=[vmem, vmem],
        out_specs=(vmem, vmem),
        cost_estimate=cost,
    )(xe, slab)

    z_mu = small[:, 0 * Z_SIZE:1 * Z_SIZE]
    z_var = small[:, 1 * Z_SIZE:2 * Z_SIZE]
    z0 = small[:, 2 * Z_SIZE:3 * Z_SIZE]
    zk = small[:, 3 * Z_SIZE:4 * Z_SIZE]
    log_det_j = small[:, 4 * Z_SIZE]
    x_mean = x_mean_flat.reshape(nb, C, H, W)
    return x_mean, z_mu, z_var, log_det_j, z0, zk


# --------------------------------- main --------------------------------------
if __name__ == "__main__":
    key = jax.random.PRNGKey(0)
    k_x, k_eps, k_params = jax.random.split(key, 3)

    x = jax.random.uniform(k_x, (B, C, H, W), jnp.float32)      # NCHW input
    eps = jax.random.normal(k_eps, (B, Z_SIZE), jnp.float32)    # reparam noise
    params = init_params(k_params)
    slab = pack_params(params)                                  # one-time packing

    outs = nice_vae_forward(x, eps, slab)
    outs = jax.block_until_ready(outs)

    x_mean, z_mu, z_var, log_det_j, z0, zk = outs
    assert x_mean.shape == (B, C, H, W)
    assert z_mu.shape == (B, Z_SIZE) and z_var.shape == (B, Z_SIZE)
    assert log_det_j.shape == (B,)
    assert z0.shape == (B, Z_SIZE) and zk.shape == (B, Z_SIZE)
    assert bool(jnp.all(jnp.isfinite(x_mean)))
    assert bool(jnp.all((x_mean >= 0.0) & (x_mean <= 1.0)))
    assert bool(jnp.all((z_var >= 1e-4) & (z_var <= 5.0)))
    assert bool(jnp.all(jnp.isfinite(zk)))

    print("KERNEL_OK")
</pallas_src>

<mosaic_0001>
module attributes {stable_mosaic.version = 11 : i64} {
  func.func @nice_vae_kernel(%arg0: memref<2x272xf32, #tpu.memory_space<vmem>>, %arg1: memref<832x128xf32, #tpu.memory_space<vmem>>, %arg2: memref<2x256xf32, #tpu.memory_space<vmem>>, %arg3: memref<2x128xf32, #tpu.memory_space<vmem>>) attributes {dimension_semantics = [], scalar_prefetch = 0 : i64, scratch_operands = 0 : i64, tpu.core_type = #tpu.core_type<tc>} {
    %c0 = arith.constant 0 : index
    %c0_0 = arith.constant 0 : index
    %0 = vector.load %arg0[%c0, %c0_0] : memref<2x272xf32, #tpu.memory_space<vmem>>, vector<2x256xf32>
    %c0_1 = arith.constant 0 : index
    %c256 = arith.constant 256 : index
    %1 = vector.load %arg0[%c0_1, %c256] : memref<2x272xf32, #tpu.memory_space<vmem>>, vector<2x16xf32>
    %c0_2 = arith.constant 0 : index
    %c0_3 = arith.constant 0 : index
    %2 = vector.load %arg1[%c0_2, %c0_3] : memref<832x128xf32, #tpu.memory_space<vmem>>, vector<256x128xf32>
    %cst = arith.constant dense<0.000000e+00> : vector<2x128xf32>
    %3 = tpu.matmul %0, %2, %cst {dimension_numbers = #tpu.dot_dimension_numbers<[1], [0], [0], [1], [0, 0, 1, 1], [], []>} : vector<2x256xf32>, vector<256x128xf32>, vector<2x128xf32> -> vector<2x128xf32>
    %c816 = arith.constant 816 : index
    %c0_4 = arith.constant 0 : index
    %4 = vector.load %arg1[%c816, %c0_4] : memref<832x128xf32, #tpu.memory_space<vmem>>, vector<1x128xf32>
    %5 = vector.broadcast %4 : vector<1x128xf32> to vector<2x128xf32>
    %6 = arith.addf %3, %5 : vector<2x128xf32>
    %cst_5 = arith.constant 0.000000e+00 : f32
    %7 = vector.broadcast %cst_5 : f32 to vector<2x128xf32>
    %8 = arith.maximumf %6, %7 : vector<2x128xf32>
    %9 = vector.extract_strided_slice %8 {offsets = [0, 0], sizes = [2, 64], strides = [1, 1]} : vector<2x128xf32> to vector<2x64xf32>
    %c256_6 = arith.constant 256 : index
    %c0_7 = arith.constant 0 : index
    %10 = vector.load %arg1[%c256_6, %c0_7] : memref<832x128xf32, #tpu.memory_space<vmem>>, vector<64x128xf32>
    %cst_8 = arith.constant dense<0.000000e+00> : vector<2x128xf32>
    %11 = tpu.matmul %9, %10, %cst_8 {dimension_numbers = #tpu.dot_dimension_numbers<[1], [0], [0], [1], [0, 0, 1, 1], [], []>} : vector<2x64xf32>, vector<64x128xf32>, vector<2x128xf32> -> vector<2x128xf32>
    %c817 = arith.constant 817 : index
    %c0_9 = arith.constant 0 : index
    %12 = vector.load %arg1[%c817, %c0_9] : memref<832x128xf32, #tpu.memory_space<vmem>>, vector<1x128xf32>
    %13 = vector.broadcast %12 : vector<1x128xf32> to vector<2x128xf32>
    %14 = arith.addf %11, %13 : vector<2x128xf32>
    %15 = vector.extract_strided_slice %14 {offsets = [0, 0], sizes = [2, 16], strides = [1, 1]} : vector<2x128xf32> to vector<2x16xf32>
    %16 = vector.extract_strided_slice %14 {offsets = [0, 16], sizes = [2, 16], strides = [1, 1]} : vector<2x128xf32> to vector<2x16xf32>
    %cst_10 = arith.constant 0.000000e+00 : f32
    %17 = vector.broadcast %cst_10 : f32 to vector<2x16xf32>
    %18 = arith.maximumf %16, %17 : vector<2x16xf32>
    %19 = math.absf %16 : vector<2x16xf32>
    %cst_11 = arith.constant 0.000000e+00 : f32
    %20 = vector.broadcast %cst_11 : f32 to vector<2x16xf32>
    %21 = arith.subf %20, %19 : vector<2x16xf32>
    %22 = math.exp %21 : vector<2x16xf32>
    %23 = math.log1p %22 : vector<2x16xf32>
    %24 = arith.addf %18, %23 : vector<2x16xf32>
    %cst_12 = arith.constant 9.99999974E-5 : f32
    %cst_13 = arith.constant 5.000000e+00 : f32
    %25 = vector.broadcast %cst_12 : f32 to vector<2x16xf32>
    %26 = arith.maximumf %25, %24 : vector<2x16xf32>
    %27 = vector.broadcast %cst_13 : f32 to vector<2x16xf32>
    %28 = arith.minimumf %27, %26 : vector<2x16xf32>
    %29 = math.sqrt %28 : vector<2x16xf32>
    %30 = arith.mulf %1, %29 : vector<2x16xf32>
    %31 = arith.addf %30, %15 : vector<2x16xf32>
    %c464 = arith.constant 464 : index
    %c0_14 = arith.constant 0 : index
    %32 = vector.load %arg1[%c464, %c0_14] : memref<832x128xf32, #tpu.memory_space<vmem>>, vector<16x128xf32>
    %cst_15 = arith.constant dense<0.000000e+00> : vector<2x128xf32>
    %33 = tpu.matmul %31, %32, %cst_15 {dimension_numbers = #tpu.dot_dimension_numbers<[1], [0], [0], [1], [0, 0, 1, 1], [], []>} : vector<2x16xf32>, vector<16x128xf32>, vector<2x128xf32> -> vector<2x128xf32>
    %c822 = arith.constant 822 : index
    %c0_16 = arith.constant 0 : index
    %34 = vector.load %arg1[%c822, %c0_16] : memref<832x128xf32, #tpu.memory_space<vmem>>, vector<1x128xf32>
    %35 = vector.broadcast %34 : vector<1x128xf32> to vector<2x128xf32>
    %36 = arith.addf %33, %35 : vector<2x128xf32>
    %cst_17 = arith.constant 0.000000e+00 : f32
    %37 = vector.broadcast %cst_17 : f32 to vector<2x128xf32>
    %38 = arith.maximumf %36, %37 : vector<2x128xf32>
    %39 = vector.extract_strided_slice %38 {offsets = [0, 0], sizes = [2, 80], strides = [1, 1]} : vector<2x128xf32> to vector<2x80xf32>
    %c496 = arith.constant 496 : index
    %c0_18 = arith.constant 0 : index
    %40 = vector.load %arg1[%c496, %c0_18] : memref<832x128xf32, #tpu.memory_space<vmem>>, vector<80x128xf32>
    %cst_19 = arith.constant dense<0.000000e+00> : vector<2x128xf32>
    %41 = tpu.matmul %39, %40, %cst_19 {dimension_numbers = #tpu.dot_dimension_numbers<[1], [0], [0], [1], [0, 0, 1, 1], [], []>} : vector<2x80xf32>, vector<80x128xf32>, vector<2x128xf32> -> vector<2x128xf32>
    %c824 = arith.constant 824 : index
    %c0_20 = arith.constant 0 : index
    %42 = vector.load %arg1[%c824, %c0_20] : memref<832x128xf32, #tpu.memory_space<vmem>>, vector<1x128xf32>
    %43 = vector.broadcast %42 : vector<1x128xf32> to vector<2x128xf32>
    %44 = arith.addf %41, %43 : vector<2x128xf32>
    %cst_21 = arith.constant 0.000000e+00 : f32
    %45 = vector.broadcast %cst_21 : f32 to vector<2x128xf32>
    %46 = arith.maximumf %44, %45 : vector<2x128xf32>
    %47 = vector.extract_strided_slice %46 {offsets = [0, 0], sizes = [2, 80], strides = [1, 1]} : vector<2x128xf32> to vector<2x80xf32>
    %c656 = arith.constant 656 : index
    %c0_22 = arith.constant 0 : index
    %48 = vector.load %arg1[%c656, %c0_22] : memref<832x128xf32, #tpu.memory_space<vmem>>, vector<80x128xf32>
    %cst_23 = arith.constant dense<0.000000e+00> : vector<2x128xf32>
    %49 = tpu.matmul %47, %48, %cst_23 {dimension_numbers = #tpu.dot_dimension_numbers<[1], [0], [0], [1], [0, 0, 1, 1], [], []>} : vector<2x80xf32>, vector<80x128xf32>, vector<2x128xf32> -> vector<2x128xf32>
    %c826 = arith.constant 826 : index
    %c0_24 = arith.constant 0 : index
    %50 = vector.load %arg1[%c826, %c0_24] : memref<832x128xf32, #tpu.memory_space<vmem>>, vector<1x128xf32>
    %51 = vector.broadcast %50 : vector<1x128xf32> to vector<2x128xf32>
    %52 = arith.addf %49, %51 : vector<2x128xf32>
    %53 = vector.extract_strided_slice %52 {offsets = [0, 0], sizes = [2, 16], strides = [1, 1]} : vector<2x128xf32> to vector<2x16xf32>
    %54 = arith.addf %31, %53 : vector<2x16xf32>
    %c480 = arith.constant 480 : index
    %c0_25 = arith.constant 0 : index
    %55 = vector.load %arg1[%c480, %c0_25] : memref<832x128xf32, #tpu.memory_space<vmem>>, vector<16x128xf32>
    %cst_26 = arith.constant dense<0.000000e+00> : vector<2x128xf32>
    %56 = tpu.matmul %54, %55, %cst_26 {dimension_numbers = #tpu.dot_dimension_numbers<[1], [0], [0], [1], [0, 0, 1, 1], [], []>} : vector<2x16xf32>, vector<16x128xf32>, vector<2x128xf32> -> vector<2x128xf32>
    %c823 = arith.constant 823 : index
    %c0_27 = arith.constant 0 : index
    %57 = vector.load %arg1[%c823, %c0_27] : memref<832x128xf32, #tpu.memory_space<vmem>>, vector<1x128xf32>
    %58 = vector.broadcast %57 : vector<1x128xf32> to vector<2x128xf32>
    %59 = arith.addf %56, %58 : vector<2x128xf32>
    %cst_28 = arith.constant 0.000000e+00 : f32
    %60 = vector.broadcast %cst_28 : f32 to vector<2x128xf32>
    %61 = arith.maximumf %59, %60 : vector<2x128xf32>
    %62 = vector.extract_strided_slice %61 {offsets = [0, 0], sizes = [2, 80], strides = [1, 1]} : vector<2x128xf32> to vector<2x80xf32>
    %c576 = arith.constant 576 : index
    %c0_29 = arith.constant 0 : index
    %63 = vector.load %arg1[%c576, %c0_29] : memref<832x128xf32, #tpu.memory_space<vmem>>, vector<80x128xf32>
    %cst_30 = arith.constant dense<0.000000e+00> : vector<2x128xf32>
    %64 = tpu.matmul %62, %63, %cst_30 {dimension_numbers = #tpu.dot_dimension_numbers<[1], [0], [0], [1], [0, 0, 1, 1], [], []>} : vector<2x80xf32>, vector<80x128xf32>, vector<2x128xf32> -> vector<2x128xf32>
    %c825 = arith.constant 825 : index
    %c0_31 = arith.constant 0 : index
    %65 = vector.load %arg1[%c825, %c0_31] : memref<832x128xf32, #tpu.memory_space<vmem>>, vector<1x128xf32>
    %66 = vector.broadcast %65 : vector<1x128xf32> to vector<2x128xf32>
    %67 = arith.addf %64, %66 : vector<2x128xf32>
    %cst_32 = arith.constant 0.000000e+00 : f32
    %68 = vector.broadcast %cst_32 : f32 to vector<2x128xf32>
    %69 = arith.maximumf %67, %68 : vector<2x128xf32>
    %70 = vector.extract_strided_slice %69 {offsets = [0, 0], sizes = [2, 80], strides = [1, 1]} : vector<2x128xf32> to vector<2x80xf32>
    %c736 = arith.constant 736 : index
    %c0_33 = arith.constant 0 : index
    %71 = vector.load %arg1[%c736, %c0_33] : memref<832x128xf32, #tpu.memory_space<vmem>>, vector<80x128xf32>
    %cst_34 = arith.constant dense<0.000000e+00> : vector<2x128xf32>
    %72 = tpu.matmul %70, %71, %cst_34 {dimension_numbers = #tpu.dot_dimension_numbers<[1], [0], [0], [1], [0, 0, 1, 1], [], []>} : vector<2x80xf32>, vector<80x128xf32>, vector<2x128xf32> -> vector<2x128xf32>
    %c827 = arith.constant 827 : index
    %c0_35 = arith.constant 0 : index
    %73 = vector.load %arg1[%c827, %c0_35] : memref<832x128xf32, #tpu.memory_space<vmem>>, vector<1x128xf32>
    %74 = vector.broadcast %73 : vector<1x128xf32> to vector<2x128xf32>
    %75 = arith.addf %72, %74 : vector<2x128xf32>
    %76 = vector.extract_strided_slice %75 {offsets = [0, 0], sizes = [2, 16], strides = [1, 1]} : vector<2x128xf32> to vector<2x16xf32>
    %77 = arith.addf %54, %76 : vector<2x16xf32>
    %c821 = arith.constant 821 : index
    %c0_36 = arith.constant 0 : index
    %78 = vector.load %arg1[%c821, %c0_36] : memref<832x128xf32, #tpu.memory_space<vmem>>, vector<1x128xf32>
    %79 = vector.extract_strided_slice %78 {offsets = [0, 0], sizes = [1, 16], strides = [1, 1]} : vector<1x128xf32> to vector<1x16xf32>
    %80 = math.exp %79 : vector<1x16xf32>
    %81 = vector.broadcast %80 : vector<1x16xf32> to vector<2x16xf32>
    %82 = arith.mulf %77, %81 : vector<2x16xf32>
    %cst_37 = arith.constant dense<0.000000e+00> : vector<1xf32>
    %83 = vector.multi_reduction <add>, %79, %cst_37 [1] : vector<1x16xf32> to vector<1xf32>
    %84 = vector.shape_cast %83 : vector<1xf32> to vector<1x1xf32>
    %c320 = arith.constant 320 : index
    %c0_38 = arith.constant 0 : index
    %85 = vector.load %arg1[%c320, %c0_38] : memref<832x128xf32, #tpu.memory_space<vmem>>, vector<16x128xf32>
    %cst_39 = arith.constant dense<0.000000e+00> : vector<2x128xf32>
    %86 = tpu.matmul %82, %85, %cst_39 {dimension_numbers = #tpu.dot_dimension_numbers<[1], [0], [0], [1], [0, 0, 1, 1], [], []>} : vector<2x16xf32>, vector<16x128xf32>, vector<2x128xf32> -> vector<2x128xf32>
    %c818 = arith.constant 818 : index
    %c0_40 = arith.constant 0 : index
    %87 = vector.load %arg1[%c818, %c0_40] : memref<832x128xf32, #tpu.memory_space<vmem>>, vector<1x128xf32>
    %88 = vector.broadcast %87 : vector<1x128xf32> to vector<2x128xf32>
    %89 = arith.addf %86, %88 : vector<2x128xf32>
    %cst_41 = arith.constant 0.000000e+00 : f32
    %90 = vector.broadcast %cst_41 : f32 to vector<2x128xf32>
    %91 = arith.maximumf %89, %90 : vector<2x128xf32>
    %92 = vector.extract_strided_slice %91 {offsets = [0, 0], sizes = [2, 64], strides = [1, 1]} : vector<2x128xf32> to vector<2x64xf32>
    %c336 = arith.constant 336 : index
    %c0_42 = arith.constant 0 : index
    %93 = vector.load %arg1[%c336, %c0_42] : memref<832x128xf32, #tpu.memory_space<vmem>>, vector<64x128xf32>
    %cst_43 = arith.constant dense<0.000000e+00> : vector<2x128xf32>
    %94 = tpu.matmul %92, %93, %cst_43 {dimension_numbers = #tpu.dot_dimension_numbers<[1], [0], [0], [1], [0, 0, 1, 1], [], []>} : vector<2x64xf32>, vector<64x128xf32>, vector<2x128xf32> -> vector<2x128xf32>
    %c819 = arith.constant 819 : index
    %c0_44 = arith.constant 0 : index
    %95 = vector.load %arg1[%c819, %c0_44] : memref<832x128xf32, #tpu.memory_space<vmem>>, vector<1x128xf32>
    %96 = vector.broadcast %95 : vector<1x128xf32> to vector<2x128xf32>
    %97 = arith.addf %94, %96 : vector<2x128xf32>
    %cst_45 = arith.constant 5.000000e-01 : f32
    %98 = vector.broadcast %cst_45 : f32 to vector<2x128xf32>
    %99 = arith.mulf %98, %97 : vector<2x128xf32>
    %100 = math.tanh %99 : vector<2x128xf32>
    %cst_46 = arith.constant 1.000000e+00 : f32
    %101 = vector.broadcast %cst_46 : f32 to vector<2x128xf32>
    %102 = arith.addf %100, %101 : vector<2x128xf32>
    %cst_47 = arith.constant 5.000000e-01 : f32
    %103 = vector.broadcast %cst_47 : f32 to vector<2x128xf32>
    %104 = arith.mulf %103, %102 : vector<2x128xf32>
    %c400 = arith.constant 400 : index
    %c0_48 = arith.constant 0 : index
    %105 = vector.load %arg1[%c400, %c0_48] : memref<832x128xf32, #tpu.memory_space<vmem>>, vector<64x128xf32>
    %cst_49 = arith.constant dense<0.000000e+00> : vector<2x128xf32>
    %106 = tpu.matmul %92, %105, %cst_49 {dimension_numbers = #tpu.dot_dimension_numbers<[1], [0], [0], [1], [0, 0, 1, 1], [], []>} : vector<2x64xf32>, vector<64x128xf32>, vector<2x128xf32> -> vector<2x128xf32>
    %c820 = arith.constant 820 : index
    %c0_50 = arith.constant 0 : index
    %107 = vector.load %arg1[%c820, %c0_50] : memref<832x128xf32, #tpu.memory_space<vmem>>, vector<1x128xf32>
    %108 = vector.broadcast %107 : vector<1x128xf32> to vector<2x128xf32>
    %109 = arith.addf %106, %108 : vector<2x128xf32>
    %cst_51 = arith.constant 5.000000e-01 : f32
    %110 = vector.broadcast %cst_51 : f32 to vector<2x128xf32>
    %111 = arith.mulf %110, %109 : vector<2x128xf32>
    %112 = math.tanh %111 : vector<2x128xf32>
    %cst_52 = arith.constant 1.000000e+00 : f32
    %113 = vector.broadcast %cst_52 : f32 to vector<2x128xf32>
    %114 = arith.addf %112, %113 : vector<2x128xf32>
    %cst_53 = arith.constant 5.000000e-01 : f32
    %115 = vector.broadcast %cst_53 : f32 to vector<2x128xf32>
    %116 = arith.mulf %115, %114 : vector<2x128xf32>
    %117 = tpu.concatenate %104, %116 in 1 : vector<2x128xf32>, vector<2x128xf32> -> vector<2x256xf32>
    %c0_54 = arith.constant 0 : index
    %c0_55 = arith.constant 0 : index
    %118 = vector.load %arg2[%c0_54, %c0_55] : memref<2x256xf32, #tpu.memory_space<vmem>>, vector<2x256xf32>
    tpu.vector_store %arg2[%c0_54, %c0_55], %117 {strides = array<i32>} : memref<2x256xf32, #tpu.memory_space<vmem>>, vector<2x256xf32>,
    %cst_56 = arith.constant 0.000000e+00 : f32
    %119 = vector.broadcast %cst_56 : f32 to vector<2x16xf32>
    %120 = vector.broadcast %84 : vector<1x1xf32> to vector<2x16xf32>
    %121 = arith.addf %119, %120 : vector<2x16xf32>
    %cst_57 = arith.constant 0.000000e+00 : f32
    %122 = vector.broadcast %cst_57 : f32 to vector<2x48xf32>
    %123 = tpu.concatenate %15, %28, %31, %82, %121, %122 in 1 : vector<2x16xf32>, vector<2x16xf32>, vector<2x16xf32>, vector<2x16xf32>, vector<2x16xf32>, vector<2x48xf32> -> vector<2x128xf32>
    %c0_58 = arith.constant 0 : index
    %c0_59 = arith.constant 0 : index
    %124 = vector.load %arg3[%c0_58, %c0_59] : memref<2x128xf32, #tpu.memory_space<vmem>>, vector<2x128xf32>
    tpu.vector_store %arg3[%c0_58, %c0_59], %123 {strides = array<i32>} : memref<2x128xf32, #tpu.memory_space<vmem>>, vector<2x128xf32>,
    return
  }
}

</mosaic_0001>

<llo_original>
// kernel: nice_vae_forward.1
$region0: #{nice_vae_forward.1}
  #allocation0 [shape = 'u32[]', space=smem, size = 0x4, offset = 0x4, fixed_abs, tag = 'smem constant byte address 0x4 - core index']
  #allocation1 [shape = 'u32[144,128]{1,0:T(1,128)}', space=vmem, size = 0x12000, scoped, tag = 'internal scratch']
  %s0 = inlined_call_operand.vmem [shape: f32[2,272], index: 0, kind: input, shape index: {}]
  %s1 = inlined_call_operand.hbm [shape: f32[832,128], index: 1, kind: input, shape index: {}]
  %s2 = inlined_call_operand.vmem [shape: f32[2,256], index: 2, kind: output, shape index: {0}]
  %s3 = inlined_call_operand.vmem [shape: f32[2,128], index: 3, kind: output, shape index: {1}]
  %4 = xla_tuple %s2, %s3
  %s5 = sld [smem:[#allocation0]]
  $region30: #{nice_vae_forward.1} parent=0
    _
  %s7 = ssub.s32 1, %s5
  %s8 = scalar_select 0, %s7, %s5
  $region1: #{nice_vae_forward.1} parent=0
    #allocation2 [shape = 'u8[425984]{0}', space=vmem, size = 0x68000, scoped, tag = 'input window, operand 1, single buffered']
    #allocation3 [shape = 's32[1]{0}', space=sflag, size = 0x4, scoped, tag = 'scoped memory for nice_vae_forward.1']
    %9 = vsyncpa [#allocation3], 0
    // Predicated region
    $region2: #{nice_vae_forward.1} parent=1 // pred_check
      _
    $region3: #{nice_vae_forward.1} parent=1 // pred_check_branch
      %11 = sbr.rel (0) target = $region5
    $region4: #{nice_vae_forward.1} parent=1 // pred_region
      _
    $region5: #{nice_vae_forward.1} parent=1 // pred_fallthru
      _
    // Predicated region
    $region6: #{nice_vae_forward.1} parent=1 // pred_check
      _
    $region7: #{nice_vae_forward.1} parent=1 // pred_check_branch
      %13 = sbr.rel (0) target = $region9
    $region8: #{nice_vae_forward.1} parent=1 // pred_region
      %s15 = ssub.s32 13312, 13312
      %16 = vsyncadd [#allocation3], %s15
      %s17 = sshll.u32 [#allocation2], 4
      %s18 = int_to_ptr.vmem [resolvable:$true] %s17
      %23 = dma.hbm_to_vmem [thread:$0]  %s1, 13312, %s18, [#allocation3], 128, 128, 8
    $region9: #{nice_vae_forward.1} parent=1 // pred_fallthru
      _
    // Predicated region
    $region10: #{nice_vae_forward.1} parent=1 // pred_check
      _
    $region11: #{nice_vae_forward.1} parent=1 // pred_check_branch
      %25 = sbr.rel (0) target = $region13
    $region12: #{nice_vae_forward.1} parent=1 // pred_region
      %26 = dma.done [#allocation3], 13312
    $region13: #{nice_vae_forward.1} parent=1 // pred_fallthru
      _
    %v27 = vld [vmem:[%s0] sm:$0xf]
    %v28 = vld [vmem:[%s0 + $0x4] sm:$0x3]
    %v29 = vld [vmem:[#allocation2] sm:$0xff]
    %v30 = vld [vmem:[#allocation2 + $0x8] sm:$0xff]
    %v31 = vld [vmem:[#allocation2 + $0x10] sm:$0xff]
    %v32 = vld [vmem:[#allocation2 + $0x18] sm:$0xff]
    %v33 = vld [vmem:[#allocation2 + $0x20] sm:$0xff]
    %v34 = vld [vmem:[#allocation2 + $0x28] sm:$0xff]
    %v35 = vld [vmem:[#allocation2 + $0x30] sm:$0xff]
    %v36 = vld [vmem:[#allocation2 + $0x38] sm:$0xff]
    %v37 = vld [vmem:[#allocation2 + $0x40] sm:$0xff]
    %v38 = vld [vmem:[#allocation2 + $0x48] sm:$0xff]
    %v39 = vld [vmem:[#allocation2 + $0x50] sm:$0xff]
    %v40 = vld [vmem:[#allocation2 + $0x58] sm:$0xff]
    %v41 = vld [vmem:[#allocation2 + $0x60] sm:$0xff]
    %v42 = vld [vmem:[#allocation2 + $0x68] sm:$0xff]
    %v43 = vld [vmem:[#allocation2 + $0x70] sm:$0xff]
    %v44 = vld [vmem:[#allocation2 + $0x78] sm:$0xff]
    %v45 = vld [vmem:[#allocation2 + $0x80] sm:$0xff]
    %v46 = vld [vmem:[#allocation2 + $0x88] sm:$0xff]
    %v47 = vld [vmem:[#allocation2 + $0x90] sm:$0xff]
    %v48 = vld [vmem:[#allocation2 + $0x98] sm:$0xff]
    %v49 = vld [vmem:[#allocation2 + $0xa0] sm:$0xff]
    %v50 = vld [vmem:[#allocation2 + $0xa8] sm:$0xff]
    %v51 = vld [vmem:[#allocation2 + $0xb0] sm:$0xff]
    %v52 = vld [vmem:[#allocation2 + $0xb8] sm:$0xff]
    %v53 = vld [vmem:[#allocation2 + $0xc0] sm:$0xff]
    %v54 = vld [vmem:[#allocation2 + $0xc8] sm:$0xff]
    %v55 = vld [vmem:[#allocation2 + $0xd0] sm:$0xff]
    %v56 = vld [vmem:[#allocation2 + $0xd8] sm:$0xff]
    %v57 = vld [vmem:[#allocation2 + $0xe0] sm:$0xff]
    %v58 = vld [vmem:[#allocation2 + $0xe8] sm:$0xff]
    %v59 = vld [vmem:[#allocation2 + $0xf0] sm:$0xff]
    %v60 = vld [vmem:[#allocation2 + $0xf8] sm:$0xff]
    %v61 = vld [vmem:[#allocation2 + $0x330] sm:$0x1]
    %v62 = vlaneseq
    %v63 = vshrl.u32 %v62, 7
    %v64 = vsub.s32 0, %v63
    %v65 = vrot.slane %v61, %v64
    %v68 = vunpack.c.l.s4 1983009808
    %v69 = vunpack.c.0.s8 %v68
    %v70 = vlaneseq
    %v71 = vshrl.u32 %v70, 7
    %v72 = vsub.s32 %v69, %v71
    %v73 = vrot.slane %v27, %v72
    %v74 = vcombine.high %v73, %v73
    %77 = vmatprep.subr.mxu0 0.0
    %78 = vmatpush1.msra.mxu0 %v29
    %79 = vmatprep.subr.mxu0 0.0
    %80 = vmatpush1.msra.mxu0 %v30
    %81 = vmatprep.subr.mxu0 0.0
    %82 = vmatpush1.msra.mxu0 %v31
    %83 = vmatprep.subr.mxu0 0.0
    %84 = vmatpush1.msra.mxu0 %v32
    %85 = vmatprep.subr.mxu0 0.0
    %86 = vmatpush1.msra.mxu0 %v33
    %87 = vmatprep.subr.mxu0 0.0
    %88 = vmatpush1.msra.mxu0 %v34
    %89 = vmatprep.subr.mxu0 0.0
    %90 = vmatpush1.msra.mxu0 %v35
    %91 = vmatprep.subr.mxu0 0.0
    %92 = vmatpush1.msra.mxu0 %v36
    %93 = vmatprep.subr.mxu0 0.0
    %94 = vmatpush1.msra.mxu0 %v37
    %95 = vmatprep.subr.mxu0 0.0
    %96 = vmatpush1.msra.mxu0 %v38
    %97 = vmatprep.subr.mxu0 0.0
    %98 = vmatpush1.msra.mxu0 %v39
    %99 = vmatprep.subr.mxu0 0.0
    %100 = vmatpush1.msra.mxu0 %v40
    %101 = vmatprep.subr.mxu0 0.0
    %102 = vmatpush1.msra.mxu0 %v41
    %103 = vmatprep.subr.mxu0 0.0
    %104 = vmatpush1.msra.mxu0 %v42
    %105 = vmatprep.subr.mxu0 0.0
    %106 = vmatpush1.msra.mxu0 %v43
    %107 = vmatprep.subr.mxu0 0.0
    %108 = vmatpush1.msra.mxu0 %v44
    %109 = vmatprep.subr.mxu0 0.0
    %110 = vmatpush1.msra.mxu0 %v45
    %111 = vmatprep.subr.mxu0 0.0
    %112 = vmatpush1.msra.mxu0 %v46
    %113 = vmatprep.subr.mxu0 0.0
    %114 = vmatpush1.msra.mxu0 %v47
    %115 = vmatprep.subr.mxu0 0.0
    %116 = vmatpush1.msra.mxu0 %v48
    %117 = vmatprep.subr.mxu0 0.0
    %118 = vmatpush1.msra.mxu0 %v49
    %119 = vmatprep.subr.mxu0 0.0
    %120 = vmatpush1.msra.mxu0 %v50
    %121 = vmatprep.subr.mxu0 0.0
    %122 = vmatpush1.msra.mxu0 %v51
    %123 = vmatprep.subr.mxu0 0.0
    %124 = vmatpush1.msra.mxu0 %v52
    %125 = vmatprep.subr.mxu0 0.0
    %126 = vmatpush1.msra.mxu0 %v53
    %127 = vmatprep.subr.mxu0 0.0
    %128 = vmatpush1.msra.mxu0 %v54
    %129 = vmatprep.subr.mxu0 0.0
    %130 = vmatpush1.msra.mxu0 %v55
    %131 = vmatprep.subr.mxu0 0.0
    %132 = vmatpush1.msra.mxu0 %v56
    %133 = vmatprep.subr.mxu0 0.0
    %134 = vmatpush1.msra.mxu0 %v57
    %135 = vmatprep.subr.mxu0 0.0
    %136 = vmatpush1.msra.mxu0 %v58
    %137 = vmatprep.subr.mxu0 0.0
    %138 = vmatpush1.msra.mxu0 %v59
    %139 = vmatprep.subr.mxu0 0.0
    %140 = vmatpush1.msra.mxu0 %v60
    %141 = vmatprep.mubr.f32.mxu0 %v74
    %142 = vmatmul.mubr.f32.gmra.mrb[0].mxu0 %v73
    %v143 = vpop.f32.mrb[0].mxu0
    %v144 = vadd.f32 %v65, %v143
    %v145 = vpop.f32.mrb[0].mxu0
    %146 = vdwg.mxu0
    %v147 = vmax.f32 %v144, 0.0
    %v148 = vld [vmem:[#allocation2 + $0x100] sm:$0xff]
    %v149 = vld [vmem:[#allocation2 + $0x108] sm:$0xff]
    %v150 = vld [vmem:[#allocation2 + $0x110] sm:$0xff]
    %v151 = vld [vmem:[#allocation2 + $0x118] sm:$0xff]
    %v152 = vld [vmem:[#allocation2 + $0x120] sm:$0xff]
    %v153 = vld [vmem:[#allocation2 + $0x128] sm:$0xff]
    %v154 = vld [vmem:[#allocation2 + $0x130] sm:$0xff]
    %v155 = vld [vmem:[#allocation2 + $0x138] sm:$0xff]
    %v156 = vld [vmem:[#allocation2 + $0x331] sm:$0x1]
    %v157 = vlaneseq
    %v158 = vshrl.u32 %v157, 7
    %v159 = vsub.s32 0, %v158
    %v160 = vrot.slane %v156, %v159
    %vm161 = vcmask 523264
    %v163 = vsel %vm161, %v147, 0
    %165 = vmatprep.subr.mxu0 0.0
    %166 = vmatpush1.msra.mxu0 %v148
    %167 = vmatprep.subr.mxu0 0.0
    %168 = vmatpush1.msra.mxu0 %v149
    %169 = vmatprep.subr.mxu0 0.0
    %170 = vmatpush1.msra.mxu0 %v150
    %171 = vmatprep.subr.mxu0 0.0
    %172 = vmatpush1.msra.mxu0 %v151
    %173 = vmatprep.subr.mxu0 0.0
    %174 = vmatpush1.msra.mxu0 %v152
    %175 = vmatprep.subr.mxu0 0.0
    %176 = vmatpush1.msra.mxu0 %v153
    %177 = vmatprep.subr.mxu0 0.0
    %178 = vmatpush1.msra.mxu0 %v154
    %179 = vmatprep.subr.mxu0 0.0
    %180 = vmatpush1.msra.mxu0 %v155
    %181 = vmatprep.subr.mxu0 0.0
    %182 = vmatpush1.msra.mxu0 0.0
    %183 = vmatprep.subr.mxu0 0.0
    %184 = vmatpush1.msra.mxu0 0.0
    %185 = vmatprep.subr.mxu0 0.0
    %186 = vmatpush1.msra.mxu0 0.0
    %187 = vmatprep.subr.mxu0 0.0
    %188 = vmatpush1.msra.mxu0 0.0
    %189 = vmatprep.subr.mxu0 0.0
    %190 = vmatpush1.msra.mxu0 0.0
    %191 = vmatprep.subr.mxu0 0.0
    %192 = vmatpush1.msra.mxu0 0.0
    %193 = vmatprep.subr.mxu0 0.0
    %194 = vmatpush1.msra.mxu0 0.0
    %195 = vmatprep.subr.mxu0 0.0
    %196 = vmatpush1.msra.mxu0 0.0
    %197 = vmatprep.subr.mxu0 0.0
    %198 = vmatpush1.msra.mxu0 0.0
    %199 = vmatprep.subr.mxu0 0.0
    %200 = vmatpush1.msra.mxu0 0.0
    %201 = vmatprep.subr.mxu0 0.0
    %202 = vmatpush1.msra.mxu0 0.0
    %203 = vmatprep.subr.mxu0 0.0
    %204 = vmatpush1.msra.mxu0 0.0
    %205 = vmatprep.subr.mxu0 0.0
    %206 = vmatpush1.msra.mxu0 0.0
    %207 = vmatprep.subr.mxu0 0.0
    %208 = vmatpush1.msra.mxu0 0.0
    %209 = vmatprep.subr.mxu0 0.0
    %210 = vmatpush1.msra.mxu0 0.0
    %211 = vmatprep.subr.mxu0 0.0
    %212 = vmatpush1.msra.mxu0 0.0
    %213 = vmatprep.subr.mxu0 0.0
    %214 = vmatpush1.msra.mxu0 0.0
    %215 = vmatprep.subr.mxu0 0.0
    %216 = vmatpush1.msra.mxu0 0.0
    %217 = vmatprep.subr.mxu0 0.0
    %218 = vmatpush1.msra.mxu0 0.0
    %219 = vmatprep.subr.mxu0 0.0
    %220 = vmatpush1.msra.mxu0 0.0
    %221 = vmatprep.subr.mxu0 0.0
    %222 = vmatpush1.msra.mxu0 0.0
    %223 = vmatprep.subr.mxu0 0.0
    %224 = vmatpush1.msra.mxu0 0.0
    %225 = vmatprep.subr.mxu0 0.0
    %226 = vmatpush1.msra.mxu0 0.0
    %227 = vmatprep.subr.mxu0 0.0
    %228 = vmatpush1.msra.mxu0 0.0
    %229 = vmatprep.mubr.f32.mxu0 0.0
    %230 = vmatmul.mubr.f32.gmra.mrb[0].mxu0 %v163
    %v231 = vpop.f32.mrb[0].mxu0
    %v232 = vadd.f32 %v160, %v231
    %v233 = vpop.f32.mrb[0].mxu0
    %234 = vdwg.mxu0
    %v235 = vmax.f32 %v232, 0.0
    %v236 = vand.u32 2147483647, %v232
    %v237 = vsub.f32 0.0, %v236
    %v238 = vmul.f32 %v237, 1.442695
    %v239 = vpow.pop %v238
    %v240 = vadd.f32 %v239, 1.0
    %v241 = vlog2.pop %v240
    %v242 = vmul.f32 %v241, 0.6931472
    %v243 = vmul.f32 -0.5, %v239
    %v244 = vadd.f32 %v243, 1.0
    %v245 = vmul.f32 %v244, %v239
    %v246 = vand.u32 2147483647, %v239
    %vm247 = vcmp.lt.f32.partialorder %v246, 0.0004427343
    %v248 = vsel %vm247, %v245, %v242
    %v249 = vadd.f32 %v235, %v248
    %v250 = vmax.f32 %v249, 0.0001
    %v251 = vmin.f32 %v250, 5.0
    %v252 = vrsqrt.pop %v251
    %v253 = vmul.f32 %v251, %v252
    %vm254 = vcmp.eq.f32.partialorder %v251, inf
    %v255 = vsel %vm254, %v251, %v253
    %vm256 = vcmp.eq.f32.partialorder %v251, 0.0
    %v257 = vand.u32 %v251, 2147483648
    %v258 = vsel %vm256, %v257, %v255
    %v261 = vunpack.c.l.s4 1983009808
    %v262 = vunpack.c.0.s8 %v261
    %v263 = vlaneseq
    %v264 = vshrl.u32 %v263, 7
    %v265 = vsub.s32 %v262, %v264
    %v266 = vrot.slane %v258, %v265
    %267 = vrot.lane.b32.xlu0 %v266, 112
    %v268 = vpop.permute.xlu0 %267
    %v270 = vmul.f32 %v28, %v268
    %v271 = vadd.f32 %v270, %v232
    %v272 = vld [vmem:[#allocation2 + $0x1d0] sm:$0xff]
    %v273 = vld [vmem:[#allocation2 + $0x1d8] sm:$0xff]
    %v274 = vld [vmem:[#allocation2 + $0x336] sm:$0x1]
    %v275 = vlaneseq
    %v276 = vshrl.u32 %v275, 7
    %v277 = vsub.s32 0, %v276
    %v278 = vrot.slane %v274, %v277
    %vm279 = vcmask 130048
    %v281 = vsel %vm279, %v271, 0
    %283 = vmatprep.subr.mxu0 0.0
    %284 = vmatpush1.msra.mxu0 %v272
    %285 = vmatprep.subr.mxu0 0.0
    %286 = vmatpush1.msra.mxu0 %v273
    %287 = vmatprep.subr.mxu0 0.0
    %288 = vmatpush1.msra.mxu0 0.0
    %289 = vmatprep.subr.mxu0 0.0
    %290 = vmatpush1.msra.mxu0 0.0
    %291 = vmatprep.subr.mxu0 0.0
    %292 = vmatpush1.msra.mxu0 0.0
    %293 = vmatprep.subr.mxu0 0.0
    %294 = vmatpush1.msra.mxu0 0.0
    %295 = vmatprep.subr.mxu0 0.0
    %296 = vmatpush1.msra.mxu0 0.0
    %297 = vmatprep.subr.mxu0 0.0
    %298 = vmatpush1.msra.mxu0 0.0
    %299 = vmatprep.subr.mxu0 0.0
    %300 = vmatpush1.msra.mxu0 0.0
    %301 = vmatprep.subr.mxu0 0.0
    %302 = vmatpush1.msra.mxu0 0.0
    %303 = vmatprep.subr.mxu0 0.0
    %304 = vmatpush1.msra.mxu0 0.0
    %305 = vmatprep.subr.mxu0 0.0
    %306 = vmatpush1.msra.mxu0 0.0
    %307 = vmatprep.subr.mxu0 0.0
    %308 = vmatpush1.msra.mxu0 0.0
    %309 = vmatprep.subr.mxu0 0.0
    %310 = vmatpush1.msra.mxu0 0.0
    %311 = vmatprep.subr.mxu0 0.0
    %312 = vmatpush1.msra.mxu0 0.0
    %313 = vmatprep.subr.mxu0 0.0
    %314 = vmatpush1.msra.mxu0 0.0
    %315 = vmatprep.subr.mxu0 0.0
    %316 = vmatpush1.msra.mxu0 0.0
    %317 = vmatprep.subr.mxu0 0.0
    %318 = vmatpush1.msra.mxu0 0.0
    %319 = vmatprep.subr.mxu0 0.0
    %320 = vmatpush1.msra.mxu0 0.0
    %321 = vmatprep.subr.mxu0 0.0
    %322 = vmatpush1.msra.mxu0 0.0
    %323 = vmatprep.subr.mxu0 0.0
    %324 = vmatpush1.msra.mxu0 0.0
    %325 = vmatprep.subr.mxu0 0.0
    %326 = vmatpush1.msra.mxu0 0.0
    %327 = vmatprep.subr.mxu0 0.0
    %328 = vmatpush1.msra.mxu0 0.0
    %329 = vmatprep.subr.mxu0 0.0
    %330 = vmatpush1.msra.mxu0 0.0
    %331 = vmatprep.subr.mxu0 0.0
    %332 = vmatpush1.msra.mxu0 0.0
    %333 = vmatprep.subr.mxu0 0.0
    %334 = vmatpush1.msra.mxu0 0.0
    %335 = vmatprep.subr.mxu0 0.0
    %336 = vmatpush1.msra.mxu0 0.0
    %337 = vmatprep.subr.mxu0 0.0
    %338 = vmatpush1.msra.mxu0 0.0
    %339 = vmatprep.subr.mxu0 0.0
    %340 = vmatpush1.msra.mxu0 0.0
    %341 = vmatprep.subr.mxu0 0.0
    %342 = vmatpush1.msra.mxu0 0.0
    %343 = vmatprep.subr.mxu0 0.0
    %344 = vmatpush1.msra.mxu0 0.0
    %345 = vmatprep.subr.mxu0 0.0
    %346 = vmatpush1.msra.mxu0 0.0
    %347 = vmatprep.mubr.f32.mxu0 0.0
    %348 = vmatmul.mubr.f32.gmra.mrb[0].mxu0 %v281
    %v349 = vpop.f32.mrb[0].mxu0
    %v350 = vadd.f32 %v278, %v349
    %v351 = vpop.f32.mrb[0].mxu0
    %352 = vdwg.mxu0
    %v353 = vmax.f32 %v350, 0.0
    %v354 = vld [vmem:[#allocation2 + $0x1f0] sm:$0xff]
    %v355 = vld [vmem:[#allocation2 + $0x1f8] sm:$0xff]
    %v356 = vld [vmem:[#allocation2 + $0x200] sm:$0xff]
    %v357 = vld [vmem:[#allocation2 + $0x208] sm:$0xff]
    %v358 = vld [vmem:[#allocation2 + $0x210] sm:$0xff]
    %v359 = vld [vmem:[#allocation2 + $0x218] sm:$0xff]
    %v360 = vld [vmem:[#allocation2 + $0x220] sm:$0xff]
    %v361 = vld [vmem:[#allocation2 + $0x228] sm:$0xff]
    %v362 = vld [vmem:[#allocation2 + $0x230] sm:$0xff]
    %v363 = vld [vmem:[#allocation2 + $0x238] sm:$0xff]
    %v364 = vld [vmem:[#allocation2 + $0x338] sm:$0x1]
    %v365 = vlaneseq
    %v366 = vshrl.u32 %v365, 7
    %v367 = vsub.s32 0, %v366
    %v368 = vrot.slane %v364, %v367
    %vm369 = vcmask 654336
    %v371 = vsel %vm369, %v353, 0
    %373 = vmatprep.subr.mxu0 0.0
    %374 = vmatpush1.msra.mxu0 %v354
    %375 = vmatprep.subr.mxu0 0.0
    %376 = vmatpush1.msra.mxu0 %v355
    %377 = vmatprep.subr.mxu0 0.0
    %378 = vmatpush1.msra.mxu0 %v356
    %379 = vmatprep.subr.mxu0 0.0
    %380 = vmatpush1.msra.mxu0 %v357
    %381 = vmatprep.subr.mxu0 0.0
    %382 = vmatpush1.msra.mxu0 %v358
    %383 = vmatprep.subr.mxu0 0.0
    %384 = vmatpush1.msra.mxu0 %v359
    %385 = vmatprep.subr.mxu0 0.0
    %386 = vmatpush1.msra.mxu0 %v360
    %387 = vmatprep.subr.mxu0 0.0
    %388 = vmatpush1.msra.mxu0 %v361
    %389 = vmatprep.subr.mxu0 0.0
    %390 = vmatpush1.msra.mxu0 %v362
    %391 = vmatprep.subr.mxu0 0.0
    %392 = vmatpush1.msra.mxu0 %v363
    %393 = vmatprep.subr.mxu0 0.0
    %394 = vmatpush1.msra.mxu0 0.0
    %395 = vmatprep.subr.mxu0 0.0
    %396 = vmatpush1.msra.mxu0 0.0
    %397 = vmatprep.subr.mxu0 0.0
    %398 = vmatpush1.msra.mxu0 0.0
    %399 = vmatprep.subr.mxu0 0.0
    %400 = vmatpush1.msra.mxu0 0.0
    %401 = vmatprep.subr.mxu0 0.0
    %402 = vmatpush1.msra.mxu0 0.0
    %403 = vmatprep.subr.mxu0 0.0
    %404 = vmatpush1.msra.mxu0 0.0
    %405 = vmatprep.subr.mxu0 0.0
    %406 = vmatpush1.msra.mxu0 0.0
    %407 = vmatprep.subr.mxu0 0.0
    %408 = vmatpush1.msra.mxu0 0.0
    %409 = vmatprep.subr.mxu0 0.0
    %410 = vmatpush1.msra.mxu0 0.0
    %411 = vmatprep.subr.mxu0 0.0
    %412 = vmatpush1.msra.mxu0 0.0
    %413 = vmatprep.subr.mxu0 0.0
    %414 = vmatpush1.msra.mxu0 0.0
    %415 = vmatprep.subr.mxu0 0.0
    %416 = vmatpush1.msra.mxu0 0.0
    %417 = vmatprep.subr.mxu0 0.0
    %418 = vmatpush1.msra.mxu0 0.0
    %419 = vmatprep.subr.mxu0 0.0
    %420 = vmatpush1.msra.mxu0 0.0
    %421 = vmatprep.subr.mxu0 0.0
    %422 = vmatpush1.msra.mxu0 0.0
    %423 = vmatprep.subr.mxu0 0.0
    %424 = vmatpush1.msra.mxu0 0.0
    %425 = vmatprep.subr.mxu0 0.0
    %426 = vmatpush1.msra.mxu0 0.0
    %427 = vmatprep.subr.mxu0 0.0
    %428 = vmatpush1.msra.mxu0 0.0
    %429 = vmatprep.subr.mxu0 0.0
    %430 = vmatpush1.msra.mxu0 0.0
    %431 = vmatprep.subr.mxu0 0.0
    %432 = vmatpush1.msra.mxu0 0.0
    %433 = vmatprep.subr.mxu0 0.0
    %434 = vmatpush1.msra.mxu0 0.0
    %435 = vmatprep.subr.mxu0 0.0
    %436 = vmatpush1.msra.mxu0 0.0
    %437 = vmatprep.mubr.f32.mxu0 0.0
    %438 = vmatmul.mubr.f32.gmra.mrb[0].mxu0 %v371
    %v439 = vpop.f32.mrb[0].mxu0
    %v440 = vadd.f32 %v368, %v439
    %v441 = vpop.f32.mrb[0].mxu0
    %442 = vdwg.mxu0
    %v443 = vmax.f32 %v440, 0.0
    %v444 = vld [vmem:[#allocation2 + $0x290] sm:$0xff]
    %v445 = vld [vmem:[#allocation2 + $0x298] sm:$0xff]
    %v446 = vld [vmem:[#allocation2 + $0x2a0] sm:$0xff]
    %v447 = vld [vmem:[#allocation2 + $0x2a8] sm:$0xff]
    %v448 = vld [vmem:[#allocation2 + $0x2b0] sm:$0xff]
    %v449 = vld [vmem:[#allocation2 + $0x2b8] sm:$0xff]
    %v450 = vld [vmem:[#allocation2 + $0x2c0] sm:$0xff]
    %v451 = vld [vmem:[#allocation2 + $0x2c8] sm:$0xff]
    %v452 = vld [vmem:[#allocation2 + $0x2d0] sm:$0xff]
    %v453 = vld [vmem:[#allocation2 + $0x2d8] sm:$0xff]
    %v454 = vld [vmem:[#allocation2 + $0x33a] sm:$0x1]
    %v455 = vlaneseq
    %v456 = vshrl.u32 %v455, 7
    %v457 = vsub.s32 0, %v456
    %v458 = vrot.slane %v454, %v457
    %v460 = vsel %vm369, %v443, 0
    %462 = vmatprep.subr.mxu0 0.0
    %463 = vmatpush1.msra.mxu0 %v444
    %464 = vmatprep.subr.mxu0 0.0
    %465 = vmatpush1.msra.mxu0 %v445
    %466 = vmatprep.subr.mxu0 0.0
    %467 = vmatpush1.msra.mxu0 %v446
    %468 = vmatprep.subr.mxu0 0.0
    %469 = vmatpush1.msra.mxu0 %v447
    %470 = vmatprep.subr.mxu0 0.0
    %471 = vmatpush1.msra.mxu0 %v448
    %472 = vmatprep.subr.mxu0 0.0
    %473 = vmatpush1.msra.mxu0 %v449
    %474 = vmatprep.subr.mxu0 0.0
    %475 = vmatpush1.msra.mxu0 %v450
    %476 = vmatprep.subr.mxu0 0.0
    %477 = vmatpush1.msra.mxu0 %v451
    %478 = vmatprep.subr.mxu0 0.0
    %479 = vmatpush1.msra.mxu0 %v452
    %480 = vmatprep.subr.mxu0 0.0
    %481 = vmatpush1.msra.mxu0 %v453
    %482 = vmatprep.subr.mxu0 0.0
    %483 = vmatpush1.msra.mxu0 0.0
    %484 = vmatprep.subr.mxu0 0.0
    %485 = vmatpush1.msra.mxu0 0.0
    %486 = vmatprep.subr.mxu0 0.0
    %487 = vmatpush1.msra.mxu0 0.0
    %488 = vmatprep.subr.mxu0 0.0
    %489 = vmatpush1.msra.mxu0 0.0
    %490 = vmatprep.subr.mxu0 0.0
    %491 = vmatpush1.msra.mxu0 0.0
    %492 = vmatprep.subr.mxu0 0.0
    %493 = vmatpush1.msra.mxu0 0.0
    %494 = vmatprep.subr.mxu0 0.0
    %495 = vmatpush1.msra.mxu0 0.0
    %496 = vmatprep.subr.mxu0 0.0
    %497 = vmatpush1.msra.mxu0 0.0
    %498 = vmatprep.subr.mxu0 0.0
    %499 = vmatpush1.msra.mxu0 0.0
    %500 = vmatprep.subr.mxu0 0.0
    %501 = vmatpush1.msra.mxu0 0.0
    %502 = vmatprep.subr.mxu0 0.0
    %503 = vmatpush1.msra.mxu0 0.0
    %504 = vmatprep.subr.mxu0 0.0
    %505 = vmatpush1.msra.mxu0 0.0
    %506 = vmatprep.subr.mxu0 0.0
    %507 = vmatpush1.msra.mxu0 0.0
    %508 = vmatprep.subr.mxu0 0.0
    %509 = vmatpush1.msra.mxu0 0.0
    %510 = vmatprep.subr.mxu0 0.0
    %511 = vmatpush1.msra.mxu0 0.0
    %512 = vmatprep.subr.mxu0 0.0
    %513 = vmatpush1.msra.mxu0 0.0
    %514 = vmatprep.subr.mxu0 0.0
    %515 = vmatpush1.msra.mxu0 0.0
    %516 = vmatprep.subr.mxu0 0.0
    %517 = vmatpush1.msra.mxu0 0.0
    %518 = vmatprep.subr.mxu0 0.0
    %519 = vmatpush1.msra.mxu0 0.0
    %520 = vmatprep.subr.mxu0 0.0
    %521 = vmatpush1.msra.mxu0 0.0
    %522 = vmatprep.subr.mxu0 0.0
    %523 = vmatpush1.msra.mxu0 0.0
    %524 = vmatprep.subr.mxu0 0.0
    %525 = vmatpush1.msra.mxu0 0.0
    %526 = vmatprep.mubr.f32.mxu0 0.0
    %527 = vmatmul.mubr.f32.gmra.mrb[0].mxu0 %v460
    %v528 = vpop.f32.mrb[0].mxu0
    %v529 = vadd.f32 %v458, %v528
    %v530 = vpop.f32.mrb[0].mxu0
    %531 = vdwg.mxu0
    %v532 = vadd.f32 %v271, %v529
    %v533 = vld [vmem:[#allocation2 + $0x1e0] sm:$0xff]
    %v534 = vld [vmem:[#allocation2 + $0x1e8] sm:$0xff]
    %v535 = vld [vmem:[#allocation2 + $0x337] sm:$0x1]
    %v536 = vlaneseq
    %v537 = vshrl.u32 %v536, 7
    %v538 = vsub.s32 0, %v537
    %v539 = vrot.slane %v535, %v538
    %v541 = vsel %vm279, %v532, 0
    %543 = vmatprep.subr.mxu0 0.0
    %544 = vmatpush1.msra.mxu0 %v533
    %545 = vmatprep.subr.mxu0 0.0
    %546 = vmatpush1.msra.mxu0 %v534
    %547 = vmatprep.subr.mxu0 0.0
    %548 = vmatpush1.msra.mxu0 0.0
    %549 = vmatprep.subr.mxu0 0.0
    %550 = vmatpush1.msra.mxu0 0.0
    %551 = vmatprep.subr.mxu0 0.0
    %552 = vmatpush1.msra.mxu0 0.0
    %553 = vmatprep.subr.mxu0 0.0
    %554 = vmatpush1.msra.mxu0 0.0
    %555 = vmatprep.subr.mxu0 0.0
    %556 = vmatpush1.msra.mxu0 0.0
    %557 = vmatprep.subr.mxu0 0.0
    %558 = vmatpush1.msra.mxu0 0.0
    %559 = vmatprep.subr.mxu0 0.0
    %560 = vmatpush1.msra.mxu0 0.0
    %561 = vmatprep.subr.mxu0 0.0
    %562 = vmatpush1.msra.mxu0 0.0
    %563 = vmatprep.subr.mxu0 0.0
    %564 = vmatpush1.msra.mxu0 0.0
    %565 = vmatprep.subr.mxu0 0.0
    %566 = vmatpush1.msra.mxu0 0.0
    %567 = vmatprep.subr.mxu0 0.0
    %568 = vmatpush1.msra.mxu0 0.0
    %569 = vmatprep.subr.mxu0 0.0
    %570 = vmatpush1.msra.mxu0 0.0
    %571 = vmatprep.subr.mxu0 0.0
    %572 = vmatpush1.msra.mxu0 0.0
    %573 = vmatprep.subr.mxu0 0.0
    %574 = vmatpush1.msra.mxu0 0.0
    %575 = vmatprep.subr.mxu0 0.0
    %576 = vmatpush1.msra.mxu0 0.0
    %577 = vmatprep.subr.mxu0 0.0
    %578 = vmatpush1.msra.mxu0 0.0
    %579 = vmatprep.subr.mxu0 0.0
    %580 = vmatpush1.msra.mxu0 0.0
    %581 = vmatprep.subr.mxu0 0.0
    %582 = vmatpush1.msra.mxu0 0.0
    %583 = vmatprep.subr.mxu0 0.0
    %584 = vmatpush1.msra.mxu0 0.0
    %585 = vmatprep.subr.mxu0 0.0
    %586 = vmatpush1.msra.mxu0 0.0
    %587 = vmatprep.subr.mxu0 0.0
    %588 = vmatpush1.msra.mxu0 0.0
    %589 = vmatprep.subr.mxu0 0.0
    %590 = vmatpush1.msra.mxu0 0.0
    %591 = vmatprep.subr.mxu0 0.0
    %592 = vmatpush1.msra.mxu0 0.0
    %593 = vmatprep.subr.mxu0 0.0
    %594 = vmatpush1.msra.mxu0 0.0
    %595 = vmatprep.subr.mxu0 0.0
    %596 = vmatpush1.msra.mxu0 0.0
    %597 = vmatprep.subr.mxu0 0.0
    %598 = vmatpush1.msra.mxu0 0.0
    %599 = vmatprep.subr.mxu0 0.0
    %600 = vmatpush1.msra.mxu0 0.0
    %601 = vmatprep.subr.mxu0 0.0
    %602 = vmatpush1.msra.mxu0 0.0
    %603 = vmatprep.subr.mxu0 0.0
    %604 = vmatpush1.msra.mxu0 0.0
    %605 = vmatprep.subr.mxu0 0.0
    %606 = vmatpush1.msra.mxu0 0.0
    %607 = vmatprep.mubr.f32.mxu0 0.0
    %608 = vmatmul.mubr.f32.gmra.mrb[0].mxu0 %v541
    %v609 = vpop.f32.mrb[0].mxu0
    %v610 = vadd.f32 %v539, %v609
    %v611 = vpop.f32.mrb[0].mxu0
    %612 = vdwg.mxu0
    %v613 = vmax.f32 %v610, 0.0
    %v614 = vld [vmem:[#allocation2 + $0x240] sm:$0xff]
    %v615 = vld [vmem:[#allocation2 + $0x248] sm:$0xff]
    %v616 = vld [vmem:[#allocation2 + $0x250] sm:$0xff]
    %v617 = vld [vmem:[#allocation2 + $0x258] sm:$0xff]
    %v618 = vld [vmem:[#allocation2 + $0x260] sm:$0xff]
    %v619 = vld [vmem:[#allocation2 + $0x268] sm:$0xff]
    %v620 = vld [vmem:[#allocation2 + $0x270] sm:$0xff]
    %v621 = vld [vmem:[#allocation2 + $0x278] sm:$0xff]
    %v622 = vld [vmem:[#allocation2 + $0x280] sm:$0xff]
    %v623 = vld [vmem:[#allocation2 + $0x288] sm:$0xff]
    %v624 = vld [vmem:[#allocation2 + $0x339] sm:$0x1]
    %v625 = vlaneseq
    %v626 = vshrl.u32 %v625, 7
    %v627 = vsub.s32 0, %v626
    %v628 = vrot.slane %v624, %v627
    %v630 = vsel %vm369, %v613, 0
    %632 = vmatprep.subr.mxu0 0.0
    %633 = vmatpush1.msra.mxu0 %v614
    %634 = vmatprep.subr.mxu0 0.0
    %635 = vmatpush1.msra.mxu0 %v615
    %636 = vmatprep.subr.mxu0 0.0
    %637 = vmatpush1.msra.mxu0 %v616
    %638 = vmatprep.subr.mxu0 0.0
    %639 = vmatpush1.msra.mxu0 %v617
    %640 = vmatprep.subr.mxu0 0.0
    %641 = vmatpush1.msra.mxu0 %v618
    %642 = vmatprep.subr.mxu0 0.0
    %643 = vmatpush1.msra.mxu0 %v619
    %644 = vmatprep.subr.mxu0 0.0
    %645 = vmatpush1.msra.mxu0 %v620
    %646 = vmatprep.subr.mxu0 0.0
    %647 = vmatpush1.msra.mxu0 %v621
    %648 = vmatprep.subr.mxu0 0.0
    %649 = vmatpush1.msra.mxu0 %v622
    %650 = vmatprep.subr.mxu0 0.0
    %651 = vmatpush1.msra.mxu0 %v623
    %652 = vmatprep.subr.mxu0 0.0
    %653 = vmatpush1.msra.mxu0 0.0
    %654 = vmatprep.subr.mxu0 0.0
    %655 = vmatpush1.msra.mxu0 0.0
    %656 = vmatprep.subr.mxu0 0.0
    %657 = vmatpush1.msra.mxu0 0.0
    %658 = vmatprep.subr.mxu0 0.0
    %659 = vmatpush1.msra.mxu0 0.0
    %660 = vmatprep.subr.mxu0 0.0
    %661 = vmatpush1.msra.mxu0 0.0
    %662 = vmatprep.subr.mxu0 0.0
    %663 = vmatpush1.msra.mxu0 0.0
    %664 = vmatprep.subr.mxu0 0.0
    %665 = vmatpush1.msra.mxu0 0.0
    %666 = vmatprep.subr.mxu0 0.0
    %667 = vmatpush1.msra.mxu0 0.0
    %668 = vmatprep.subr.mxu0 0.0
    %669 = vmatpush1.msra.mxu0 0.0
    %670 = vmatprep.subr.mxu0 0.0
    %671 = vmatpush1.msra.mxu0 0.0
    %672 = vmatprep.subr.mxu0 0.0
    %673 = vmatpush1.msra.mxu0 0.0
    %674 = vmatprep.subr.mxu0 0.0
    %675 = vmatpush1.msra.mxu0 0.0
    %676 = vmatprep.subr.mxu0 0.0
    %677 = vmatpush1.msra.mxu0 0.0
    %678 = vmatprep.subr.mxu0 0.0
    %679 = vmatpush1.msra.mxu0 0.0
    %680 = vmatprep.subr.mxu0 0.0
    %681 = vmatpush1.msra.mxu0 0.0
    %682 = vmatprep.subr.mxu0 0.0
    %683 = vmatpush1.msra.mxu0 0.0
    %684 = vmatprep.subr.mxu0 0.0
    %685 = vmatpush1.msra.mxu0 0.0
    %686 = vmatprep.subr.mxu0 0.0
    %687 = vmatpush1.msra.mxu0 0.0
    %688 = vmatprep.subr.mxu0 0.0
    %689 = vmatpush1.msra.mxu0 0.0
    %690 = vmatprep.subr.mxu0 0.0
    %691 = vmatpush1.msra.mxu0 0.0
    %692 = vmatprep.subr.mxu0 0.0
    %693 = vmatpush1.msra.mxu0 0.0
    %694 = vmatprep.subr.mxu0 0.0
    %695 = vmatpush1.msra.mxu0 0.0
    %696 = vmatprep.mubr.f32.mxu0 0.0
    %697 = vmatmul.mubr.f32.gmra.mrb[0].mxu0 %v630
    %v698 = vpop.f32.mrb[0].mxu0
    %v699 = vadd.f32 %v628, %v698
    %v700 = vpop.f32.mrb[0].mxu0
    %701 = vdwg.mxu0
    %v702 = vmax.f32 %v699, 0.0
    %v703 = vld [vmem:[#allocation2 + $0x2e0] sm:$0xff]
    %v704 = vld [vmem:[#allocation2 + $0x2e8] sm:$0xff]
    %v705 = vld [vmem:[#allocation2 + $0x2f0] sm:$0xff]
    %v706 = vld [vmem:[#allocation2 + $0x2f8] sm:$0xff]
    %v707 = vld [vmem:[#allocation2 + $0x300] sm:$0xff]
    %v708 = vld [vmem:[#allocation2 + $0x308] sm:$0xff]
    %v709 = vld [vmem:[#allocation2 + $0x310] sm:$0xff]
    %v710 = vld [vmem:[#allocation2 + $0x318] sm:$0xff]
    %v711 = vld [vmem:[#allocation2 + $0x320] sm:$0xff]
    %v712 = vld [vmem:[#allocation2 + $0x328] sm:$0xff]
    %v713 = vld [vmem:[#allocation2 + $0x33b] sm:$0x1]
    %v714 = vlaneseq
    %v715 = vshrl.u32 %v714, 7
    %v716 = vsub.s32 0, %v715
    %v717 = vrot.slane %v713, %v716
    %v719 = vsel %vm369, %v702, 0
    %721 = vmatprep.subr.mxu0 0.0
    %722 = vmatpush1.msra.mxu0 %v703
    %723 = vmatprep.subr.mxu0 0.0
    %724 = vmatpush1.msra.mxu0 %v704
    %725 = vmatprep.subr.mxu0 0.0
    %726 = vmatpush1.msra.mxu0 %v705
    %727 = vmatprep.subr.mxu0 0.0
    %728 = vmatpush1.msra.mxu0 %v706
    %729 = vmatprep.subr.mxu0 0.0
    %730 = vmatpush1.msra.mxu0 %v707
    %731 = vmatprep.subr.mxu0 0.0
    %732 = vmatpush1.msra.mxu0 %v708
    %733 = vmatprep.subr.mxu0 0.0
    %734 = vmatpush1.msra.mxu0 %v709
    %735 = vmatprep.subr.mxu0 0.0
    %736 = vmatpush1.msra.mxu0 %v710
    %737 = vmatprep.subr.mxu0 0.0
    %738 = vmatpush1.msra.mxu0 %v711
    %739 = vmatprep.subr.mxu0 0.0
    %740 = vmatpush1.msra.mxu0 %v712
    %741 = vmatprep.subr.mxu0 0.0
    %742 = vmatpush1.msra.mxu0 0.0
    %743 = vmatprep.subr.mxu0 0.0
    %744 = vmatpush1.msra.mxu0 0.0
    %745 = vmatprep.subr.mxu0 0.0
    %746 = vmatpush1.msra.mxu0 0.0
    %747 = vmatprep.subr.mxu0 0.0
    %748 = vmatpush1.msra.mxu0 0.0
    %749 = vmatprep.subr.mxu0 0.0
    %750 = vmatpush1.msra.mxu0 0.0
    %751 = vmatprep.subr.mxu0 0.0
    %752 = vmatpush1.msra.mxu0 0.0
    %753 = vmatprep.subr.mxu0 0.0
    %754 = vmatpush1.msra.mxu0 0.0
    %755 = vmatprep.subr.mxu0 0.0
    %756 = vmatpush1.msra.mxu0 0.0
    %757 = vmatprep.subr.mxu0 0.0
    %758 = vmatpush1.msra.mxu0 0.0
    %759 = vmatprep.subr.mxu0 0.0
    %760 = vmatpush1.msra.mxu0 0.0
    %761 = vmatprep.subr.mxu0 0.0
    %762 = vmatpush1.msra.mxu0 0.0
    %763 = vmatprep.subr.mxu0 0.0
    %764 = vmatpush1.msra.mxu0 0.0
    %765 = vmatprep.subr.mxu0 0.0
    %766 = vmatpush1.msra.mxu0 0.0
    %767 = vmatprep.subr.mxu0 0.0
    %768 = vmatpush1.msra.mxu0 0.0
    %769 = vmatprep.subr.mxu0 0.0
    %770 = vmatpush1.msra.mxu0 0.0
    %771 = vmatprep.subr.mxu0 0.0
    %772 = vmatpush1.msra.mxu0 0.0
    %773 = vmatprep.subr.mxu0 0.0
    %774 = vmatpush1.msra.mxu0 0.0
    %775 = vmatprep.subr.mxu0 0.0
    %776 = vmatpush1.msra.mxu0 0.0
    %777 = vmatprep.subr.mxu0 0.0
    %778 = vmatpush1.msra.mxu0 0.0
    %779 = vmatprep.subr.mxu0 0.0
    %780 = vmatpush1.msra.mxu0 0.0
    %781 = vmatprep.subr.mxu0 0.0
    %782 = vmatpush1.msra.mxu0 0.0
    %783 = vmatprep.subr.mxu0 0.0
    %784 = vmatpush1.msra.mxu0 0.0
    %785 = vmatprep.mubr.f32.mxu0 0.0
    %786 = vmatmul.mubr.f32.gmra.mrb[0].mxu0 %v719
    %v787 = vpop.f32.mrb[0].mxu0
    %v788 = vadd.f32 %v717, %v787
    %v789 = vpop.f32.mrb[0].mxu0
    %790 = vdwg.mxu0
    %v791 = vadd.f32 %v532, %v788
    %v792 = vld [vmem:[#allocation2 + $0x335] sm:$0x1]
    %v793 = vmul.f32 %v792, 1.442695
    %v794 = vpow.pop %v793
    %v795 = vlaneseq
    %v796 = vshrl.u32 %v795, 7
    %v797 = vsub.s32 0, %v796
    %v798 = vrot.slane %v794, %v797
    %v799 = vmul.f32 %v791, %v798
    %vm800 = vcmask 122880
    %v801 = vsel %vm800, %v792, 0.0
    %802 = vadd.xlane.f32.xlu0 %v801
    %v803 = vpop.xlane.xlu0 %802
    %v804 = vld [vmem:[#allocation2 + $0x140] sm:$0xff]
    %v805 = vld [vmem:[#allocation2 + $0x148] sm:$0xff]
    %v806 = vld [vmem:[#allocation2 + $0x332] sm:$0x1]
    %v807 = vlaneseq
    %v808 = vshrl.u32 %v807, 7
    %v809 = vsub.s32 0, %v808
    %v810 = vrot.slane %v806, %v809
    %v812 = vsel %vm279, %v799, 0
    %814 = vmatprep.subr.mxu0 0.0
    %815 = vmatpush1.msra.mxu0 %v804
    %816 = vmatprep.subr.mxu0 0.0
    %817 = vmatpush1.msra.mxu0 %v805
    %818 = vmatprep.subr.mxu0 0.0
    %819 = vmatpush1.msra.mxu0 0.0
    %820 = vmatprep.subr.mxu0 0.0
    %821 = vmatpush1.msra.mxu0 0.0
    %822 = vmatprep.subr.mxu0 0.0
    %823 = vmatpush1.msra.mxu0 0.0
    %824 = vmatprep.subr.mxu0 0.0
    %825 = vmatpush1.msra.mxu0 0.0
    %826 = vmatprep.subr.mxu0 0.0
    %827 = vmatpush1.msra.mxu0 0.0
    %828 = vmatprep.subr.mxu0 0.0
    %829 = vmatpush1.msra.mxu0 0.0
    %830 = vmatprep.subr.mxu0 0.0
    %831 = vmatpush1.msra.mxu0 0.0
    %832 = vmatprep.subr.mxu0 0.0
    %833 = vmatpush1.msra.mxu0 0.0
    %834 = vmatprep.subr.mxu0 0.0
    %835 = vmatpush1.msra.mxu0 0.0
    %836 = vmatprep.subr.mxu0 0.0
    %837 = vmatpush1.msra.mxu0 0.0
    %838 = vmatprep.subr.mxu0 0.0
    %839 = vmatpush1.msra.mxu0 0.0
    %840 = vmatprep.subr.mxu0 0.0
    %841 = vmatpush1.msra.mxu0 0.0
    %842 = vmatprep.subr.mxu0 0.0
    %843 = vmatpush1.msra.mxu0 0.0
    %844 = vmatprep.subr.mxu0 0.0
    %845 = vmatpush1.msra.mxu0 0.0
    %846 = vmatprep.subr.mxu0 0.0
    %847 = vmatpush1.msra.mxu0 0.0
    %848 = vmatprep.subr.mxu0 0.0
    %849 = vmatpush1.msra.mxu0 0.0
    %850 = vmatprep.subr.mxu0 0.0
    %851 = vmatpush1.msra.mxu0 0.0
    %852 = vmatprep.subr.mxu0 0.0
    %853 = vmatpush1.msra.mxu0 0.0
    %854 = vmatprep.subr.mxu0 0.0
    %855 = vmatpush1.msra.mxu0 0.0
    %856 = vmatprep.subr.mxu0 0.0
    %857 = vmatpush1.msra.mxu0 0.0
    %858 = vmatprep.subr.mxu0 0.0
    %859 = vmatpush1.msra.mxu0 0.0
    %860 = vmatprep.subr.mxu0 0.0
    %861 = vmatpush1.msra.mxu0 0.0
    %862 = vmatprep.subr.mxu0 0.0
    %863 = vmatpush1.msra.mxu0 0.0
    %864 = vmatprep.subr.mxu0 0.0
    %865 = vmatpush1.msra.mxu0 0.0
    %866 = vmatprep.subr.mxu0 0.0
    %867 = vmatpush1.msra.mxu0 0.0
    %868 = vmatprep.subr.mxu0 0.0
    %869 = vmatpush1.msra.mxu0 0.0
    %870 = vmatprep.subr.mxu0 0.0
    %871 = vmatpush1.msra.mxu0 0.0
    %872 = vmatprep.subr.mxu0 0.0
    %873 = vmatpush1.msra.mxu0 0.0
    %874 = vmatprep.subr.mxu0 0.0
    %875 = vmatpush1.msra.mxu0 0.0
    %876 = vmatprep.subr.mxu0 0.0
    %877 = vmatpush1.msra.mxu0 0.0
    %878 = vmatprep.mubr.f32.mxu0 0.0
    %879 = vmatmul.mubr.f32.gmra.mrb[0].mxu0 %v812
    %v880 = vpop.f32.mrb[0].mxu0
    %v881 = vadd.f32 %v810, %v880
    %v882 = vpop.f32.mrb[0].mxu0
    %883 = vdwg.mxu0
    %v884 = vmax.f32 %v881, 0.0
    %v885 = vld [vmem:[#allocation2 + $0x150] sm:$0xff]
    %v886 = vld [vmem:[#allocation2 + $0x158] sm:$0xff]
    %v887 = vld [vmem:[#allocation2 + $0x160] sm:$0xff]
    %v888 = vld [vmem:[#allocation2 + $0x168] sm:$0xff]
    %v889 = vld [vmem:[#allocation2 + $0x170] sm:$0xff]
    %v890 = vld [vmem:[#allocation2 + $0x178] sm:$0xff]
    %v891 = vld [vmem:[#allocation2 + $0x180] sm:$0xff]
    %v892 = vld [vmem:[#allocation2 + $0x188] sm:$0xff]
    %v893 = vld [vmem:[#allocation2 + $0x333] sm:$0x1]
    %v894 = vlaneseq
    %v895 = vshrl.u32 %v894, 7
    %v896 = vsub.s32 0, %v895
    %v897 = vrot.slane %v893, %v896
    %v899 = vsel %vm161, %v884, 0
    %901 = vmatprep.subr.mxu0 0.0
    %902 = vmatpush1.msra.mxu0 %v885
    %903 = vmatprep.subr.mxu0 0.0
    %904 = vmatpush1.msra.mxu0 %v886
    %905 = vmatprep.subr.mxu0 0.0
    %906 = vmatpush1.msra.mxu0 %v887
    %907 = vmatprep.subr.mxu0 0.0
    %908 = vmatpush1.msra.mxu0 %v888
    %909 = vmatprep.subr.mxu0 0.0
    %910 = vmatpush1.msra.mxu0 %v889
    %911 = vmatprep.subr.mxu0 0.0
    %912 = vmatpush1.msra.mxu0 %v890
    %913 = vmatprep.subr.mxu0 0.0
    %914 = vmatpush1.msra.mxu0 %v891
    %915 = vmatprep.subr.mxu0 0.0
    %916 = vmatpush1.msra.mxu0 %v892
    %917 = vmatprep.subr.mxu0 0.0
    %918 = vmatpush1.msra.mxu0 0.0
    %919 = vmatprep.subr.mxu0 0.0
    %920 = vmatpush1.msra.mxu0 0.0
    %921 = vmatprep.subr.mxu0 0.0
    %922 = vmatpush1.msra.mxu0 0.0
    %923 = vmatprep.subr.mxu0 0.0
    %924 = vmatpush1.msra.mxu0 0.0
    %925 = vmatprep.subr.mxu0 0.0
    %926 = vmatpush1.msra.mxu0 0.0
    %927 = vmatprep.subr.mxu0 0.0
    %928 = vmatpush1.msra.mxu0 0.0
    %929 = vmatprep.subr.mxu0 0.0
    %930 = vmatpush1.msra.mxu0 0.0
    %931 = vmatprep.subr.mxu0 0.0
    %932 = vmatpush1.msra.mxu0 0.0
    %933 = vmatprep.subr.mxu0 0.0
    %934 = vmatpush1.msra.mxu0 0.0
    %935 = vmatprep.subr.mxu0 0.0
    %936 = vmatpush1.msra.mxu0 0.0
    %937 = vmatprep.subr.mxu0 0.0
    %938 = vmatpush1.msra.mxu0 0.0
    %939 = vmatprep.subr.mxu0 0.0
    %940 = vmatpush1.msra.mxu0 0.0
    %941 = vmatprep.subr.mxu0 0.0
    %942 = vmatpush1.msra.mxu0 0.0
    %943 = vmatprep.subr.mxu0 0.0
    %944 = vmatpush1.msra.mxu0 0.0
    %945 = vmatprep.subr.mxu0 0.0
    %946 = vmatpush1.msra.mxu0 0.0
    %947 = vmatprep.subr.mxu0 0.0
    %948 = vmatpush1.msra.mxu0 0.0
    %949 = vmatprep.subr.mxu0 0.0
    %950 = vmatpush1.msra.mxu0 0.0
    %951 = vmatprep.subr.mxu0 0.0
    %952 = vmatpush1.msra.mxu0 0.0
    %953 = vmatprep.subr.mxu0 0.0
    %954 = vmatpush1.msra.mxu0 0.0
    %955 = vmatprep.subr.mxu0 0.0
    %956 = vmatpush1.msra.mxu0 0.0
    %957 = vmatprep.subr.mxu0 0.0
    %958 = vmatpush1.msra.mxu0 0.0
    %959 = vmatprep.subr.mxu0 0.0
    %960 = vmatpush1.msra.mxu0 0.0
    %961 = vmatprep.subr.mxu0 0.0
    %962 = vmatpush1.msra.mxu0 0.0
    %963 = vmatprep.subr.mxu0 0.0
    %964 = vmatpush1.msra.mxu0 0.0
    %965 = vmatprep.mubr.f32.mxu0 0.0
    %966 = vmatmul.mubr.f32.gmra.mrb[0].mxu0 %v899
    %v967 = vpop.f32.mrb[0].mxu0
    %v968 = vadd.f32 %v897, %v967
    %v969 = vpop.f32.mrb[0].mxu0
    %970 = vdwg.mxu0
    %v971 = vmul.f32 %v968, 0.5
    %v972 = vtanh.pop %v971
    %v973 = vadd.f32 %v972, 1.0
    %v974 = vmul.f32 %v973, 0.5
    %v975 = vld [vmem:[#allocation2 + $0x190] sm:$0xff]
    %v976 = vld [vmem:[#allocation2 + $0x198] sm:$0xff]
    %v977 = vld [vmem:[#allocation2 + $0x1a0] sm:$0xff]
    %v978 = vld [vmem:[#allocation2 + $0x1a8] sm:$0xff]
    %v979 = vld [vmem:[#allocation2 + $0x1b0] sm:$0xff]
    %v980 = vld [vmem:[#allocation2 + $0x1b8] sm:$0xff]
    %v981 = vld [vmem:[#allocation2 + $0x1c0] sm:$0xff]
    %v982 = vld [vmem:[#allocation2 + $0x1c8] sm:$0xff]
    %v983 = vld [vmem:[#allocation2 + $0x334] sm:$0x1]
    %v984 = vlaneseq
    %v985 = vshrl.u32 %v984, 7
    %v986 = vsub.s32 0, %v985
    %v987 = vrot.slane %v983, %v986
    %988 = vmatprep.subr.mxu0 0.0
    %989 = vmatpush1.msra.mxu0 %v975
    %990 = vmatprep.subr.mxu0 0.0
    %991 = vmatpush1.msra.mxu0 %v976
    %992 = vmatprep.subr.mxu0 0.0
    %993 = vmatpush1.msra.mxu0 %v977
    %994 = vmatprep.subr.mxu0 0.0
    %995 = vmatpush1.msra.mxu0 %v978
    %996 = vmatprep.subr.mxu0 0.0
    %997 = vmatpush1.msra.mxu0 %v979
    %998 = vmatprep.subr.mxu0 0.0
    %999 = vmatpush1.msra.mxu0 %v980
    %1000 = vmatprep.subr.mxu0 0.0
    %1001 = vmatpush1.msra.mxu0 %v981
    %1002 = vmatprep.subr.mxu0 0.0
    %1003 = vmatpush1.msra.mxu0 %v982
    %1004 = vmatprep.subr.mxu0 0.0
    %1005 = vmatpush1.msra.mxu0 0.0
    %1006 = vmatprep.subr.mxu0 0.0
    %1007 = vmatpush1.msra.mxu0 0.0
    %1008 = vmatprep.subr.mxu0 0.0
    %1009 = vmatpush1.msra.mxu0 0.0
    %1010 = vmatprep.subr.mxu0 0.0
    %1011 = vmatpush1.msra.mxu0 0.0
    %1012 = vmatprep.subr.mxu0 0.0
    %1013 = vmatpush1.msra.mxu0 0.0
    %1014 = vmatprep.subr.mxu0 0.0
    %1015 = vmatpush1.msra.mxu0 0.0
    %1016 = vmatprep.subr.mxu0 0.0
    %1017 = vmatpush1.msra.mxu0 0.0
    %1018 = vmatprep.subr.mxu0 0.0
    %1019 = vmatpush1.msra.mxu0 0.0
    %1020 = vmatprep.subr.mxu0 0.0
    %1021 = vmatpush1.msra.mxu0 0.0
    %1022 = vmatprep.subr.mxu0 0.0
    %1023 = vmatpush1.msra.mxu0 0.0
    %1024 = vmatprep.subr.mxu0 0.0
    %1025 = vmatpush1.msra.mxu0 0.0
    %1026 = vmatprep.subr.mxu0 0.0
    %1027 = vmatpush1.msra.mxu0 0.0
    %1028 = vmatprep.subr.mxu0 0.0
    %1029 = vmatpush1.msra.mxu0 0.0
    %1030 = vmatprep.subr.mxu0 0.0
    %1031 = vmatpush1.msra.mxu0 0.0
    %1032 = vmatprep.subr.mxu0 0.0
    %1033 = vmatpush1.msra.mxu0 0.0
    %1034 = vmatprep.subr.mxu0 0.0
    %1035 = vmatpush1.msra.mxu0 0.0
    %1036 = vmatprep.subr.mxu0 0.0
    %1037 = vmatpush1.msra.mxu0 0.0
    %1038 = vmatprep.subr.mxu0 0.0
    %1039 = vmatpush1.msra.mxu0 0.0
    %1040 = vmatprep.subr.mxu0 0.0
    %1041 = vmatpush1.msra.mxu0 0.0
    %1042 = vmatprep.subr.mxu0 0.0
    %1043 = vmatpush1.msra.mxu0 0.0
    %1044 = vmatprep.subr.mxu0 0.0
    %1045 = vmatpush1.msra.mxu0 0.0
    %1046 = vmatprep.subr.mxu0 0.0
    %1047 = vmatpush1.msra.mxu0 0.0
    %1048 = vmatprep.subr.mxu0 0.0
    %1049 = vmatpush1.msra.mxu0 0.0
    %1050 = vmatprep.subr.mxu0 0.0
    %1051 = vmatpush1.msra.mxu0 0.0
    %1052 = vmatprep.mubr.f32.mxu0 0.0
    %1053 = vmatmul.mubr.f32.gmra.mrb[0].mxu0 %v899
    %v1054 = vpop.f32.mrb[0].mxu0
    %v1055 = vadd.f32 %v987, %v1054
    %v1056 = vpop.f32.mrb[0].mxu0
    %1057 = vdwg.mxu0
    %v1058 = vmul.f32 %v1055, 0.5
    %v1059 = vtanh.pop %v1058
    %v1060 = vadd.f32 %v1059, 1.0
    %v1061 = vmul.f32 %v1060, 0.5
    %v1064 = vcombine.low %v974, %v1061
    %v1066 = vunpack.c.l.s4 1983009808
    %v1067 = vunpack.c.0.s8 %v1066
    %v1068 = vlaneseq
    %v1069 = vshrl.u32 %v1068, 7
    %v1070 = vsub.s32 %v1067, %v1069
    %v1071 = vrot.slane %v1064, %v1070
    %1073 = vst [vmem:[%s2] sm:$0xf] %v1071
    %v1074 = vlaneseq
    %v1075 = vshrl.u32 %v1074, 7
    %v1076 = vsub.s32 0, %v1075
    %v1077 = vrot.slane %v803, %v1076
    %v1078 = vadd.f32 %v1077, 0.0
    %v1080 = vunpack.c.l.s4 1983009808
    %v1081 = vunpack.c.0.s8 %v1080
    %v1082 = vlaneseq
    %v1083 = vshrl.u32 %v1082, 7
    %v1084 = vsub.s32 %v1081, %v1083
    %v1085 = vrot.slane %v271, %v1084
    %1086 = vrot.lane.b32.xlu0 %v1085, 32
    %v1087 = vpop.permute.xlu0 %1086
    %v1090 = vunpack.c.l.s4 1983009808
    %v1091 = vunpack.c.0.s8 %v1090
    %v1092 = vlaneseq
    %v1093 = vshrl.u32 %v1092, 7
    %v1094 = vsub.s32 %v1091, %v1093
    %v1095 = vrot.slane %v799, %v1094
    %1096 = vrot.lane.b32.xlu0 %v1095, 48
    %v1097 = vpop.permute.xlu0 %1096
    %v1099 = vsel %vm279, %v232, %v251
    %vm1100 = vcmask 261120
    %v1101 = vsel %vm1100, %v1099, %v1087
    %vm1102 = vcmask 392192
    %v1103 = vsel %vm1102, %v1101, %v1097
    %v1104 = vsel %vm161, %v1103, %v1078
    %v1105 = vsel %vm369, %v1104, 0.0
    %1106 = vst [vmem:[%s3] sm:$0x3] %v1105
    // Predicated region
    $region14: #{nice_vae_forward.1} parent=1 // pred_check
      _
    $region15: #{nice_vae_forward.1} parent=1 // pred_check_branch
      %1108 = sbr.rel (0) target = $region17
    $region16: #{nice_vae_forward.1} parent=1 // pred_region
      _
    $region17: #{nice_vae_forward.1} parent=1 // pred_fallthru
      _
    // Predicated region
    $region18: #{nice_vae_forward.1} parent=1 // pred_check
      _
    $region19: #{nice_vae_forward.1} parent=1 // pred_check_branch
      %1110 = sbr.rel (0) target = $region21
    $region20: #{nice_vae_forward.1} parent=1 // pred_region
      _
    $region21: #{nice_vae_forward.1} parent=1 // pred_fallthru
      _
    // Predicated region
    $region22: #{nice_vae_forward.1} parent=1 // pred_check
      _
    $region23: #{nice_vae_forward.1} parent=1 // pred_check_branch
      %1112 = sbr.rel (0) target = $region25
    $region24: #{nice_vae_forward.1} parent=1 // pred_region
      _
    $region25: #{nice_vae_forward.1} parent=1 // pred_fallthru
      _
    // Predicated region
    $region26: #{nice_vae_forward.1} parent=1 // pred_check
      _
    $region27: #{nice_vae_forward.1} parent=1 // pred_check_branch
      %1114 = sbr.rel (0) target = $region29
    $region28: #{nice_vae_forward.1} parent=1 // pred_region
      _
    $region29: #{nice_vae_forward.1} parent=1 // pred_fallthru
      _
    %1115 = vsyncpa [#allocation3], 1

</llo_original>
